<compile_context>
chip_gen: v7x
topology: tpu7x:2x2x1
jax: 0.10.0
libtpu: 0.0.40
codegen_flags: <defaults>
</compile_context>

<pallas_src>
import functools

import jax
import jax.numpy as jnp
from jax.experimental import pallas as pl
from jax.experimental.pallas import tpu as pltpu


# ---------------------------------------------------------------------------
# Fused Encoder kernel: one grid step == `batch_tile` batch elements.
# ---------------------------------------------------------------------------
def encoder_kernel(x_ref, wqkv_ref, bqkv_ref, wo_ref, bo_ref, g1_ref, be1_ref,
                   w1_ref, b1_ref, w2_ref, b2_ref, g2_ref, be2_ref, out_ref,
                   *, num_head, eps):
    f32 = jnp.float32
    bf16 = jnp.bfloat16

    Bt, S, D = x_ref.shape
    H = num_head
    dh = D // H
    m = S // H                      # sequence rows owned by one PyTorch-view head
    scale = float(dh) ** -0.5

    # Resident weights / biases (read once, reused for every batch element).
    wqkv = wqkv_ref[...]            # (D, 3D) bf16
    bqkv = bqkv_ref[...]            # (1, 3D) f32
    wo = wo_ref[...]                # (D, D)  bf16
    bo = bo_ref[...]                # (1, D)  f32
    g1, be1 = g1_ref[...], be1_ref[...]
    w1, b1 = w1_ref[...], b1_ref[...]
    w2, b2 = w2_ref[...], b2_ref[...]
    g2, be2 = g2_ref[...], be2_ref[...]

    def layer_norm(z, g, b):
        mu = jnp.mean(z, axis=-1, keepdims=True)
        var = jnp.mean((z - mu) ** 2, axis=-1, keepdims=True)
        return (z - mu) * jax.lax.rsqrt(var + eps) * g + b

    def make_heads(mat):
        # mat: (S, D) f32  ->  (H, S, dh) grouped by PyTorch head.
        # With S % H == 0, head h of Q.view(B*H, -1, dh) owns rows [h*m, (h+1)*m)
        # of `mat`, re-chunked into S rows of dh lanes.  Rows are laid out
        # chunk-major (c*m + j) — a within-head permutation that the fold-back
        # below inverts — built from static lane/sublane slices + concats only
        # (no lane-splitting reshape in-kernel).
        chunks = [mat[:, c * dh:(c + 1) * dh] for c in range(H)]        # H x (S, dh)
        heads = [jnp.concatenate([ch[h * m:(h + 1) * m, :] for ch in chunks],
                                 axis=0)                                 # (S, dh)
                 for h in range(H)]
        return jnp.stack(heads, axis=0)                                  # (H, S, dh)

    for b in range(Bt):
        x = x_ref[b]                                                     # (S, D) f32

        # ---- fused Q/K/V projection: one (S, D) @ (D, 3D) MXU pass ----------
        qkv = jnp.dot(x.astype(bf16), wqkv,
                      preferred_element_type=f32) + bqkv                 # (S, 3D)

        q3 = make_heads(qkv[:, 0 * D:1 * D]).astype(bf16)                # (H, S, dh)
        k3 = make_heads(qkv[:, 1 * D:2 * D]).astype(bf16)
        v3 = make_heads(qkv[:, 2 * D:3 * D]).astype(bf16)

        # ---- per-head batched attention (no mask, no SHxSH inflation) -------
        att = jnp.einsum('hqe,hke->hqk', q3, k3,
                         preferred_element_type=f32) * scale             # (H, S, S)
        att = att - jnp.max(att, axis=-1, keepdims=True)
        p = jnp.exp(att)
        p = p / jnp.sum(p, axis=-1, keepdims=True)                       # exact div
        ctx3 = jnp.einsum('hqk,hke->hqe', p.astype(bf16), v3,
                          preferred_element_type=f32)                    # (H, S, dh)

        # ---- fold context back to the original (S, D) row layout ------------
        # (inverse of the chunk-major within-head permutation)
        rows = [jnp.concatenate([ctx3[h, c * m:(c + 1) * m, :] for c in range(H)],
                                axis=1)                                  # (m, D)
                for h in range(H)]
        ctx = jnp.concatenate(rows, axis=0)                              # (S, D)

        # ---- single full-width output projection + residual + LayerNorm -----
        attn = x + bo + jnp.dot(ctx.astype(bf16), wo,
                                preferred_element_type=f32)
        y1 = layer_norm(attn, g1, be1)

        # ---- position-wise FFN + residual + LayerNorm ------------------------
        h1 = jnp.dot(y1.astype(bf16), w1, preferred_element_type=f32) + b1
        h1 = jnp.maximum(h1, 0.0)
        y2 = jnp.dot(h1.astype(bf16), w2, preferred_element_type=f32) + b2 + y1
        out_ref[b, :, :] = layer_norm(y2, g2, be2)


# ---------------------------------------------------------------------------
# Parameter construction (PyTorch nn.Linear convention, stored pre-transposed
# to (in, out); LayerNorm gamma=1, beta=0 as at fresh init).  All f32.
# ---------------------------------------------------------------------------
def init_encoder_params(key, dim_model, num_head, hidden):
    del num_head
    ks = jax.random.split(key, 6)
    scale = 0.05

    def lin(k, d_in, d_out):
        w = scale * jax.random.normal(k, (d_in, d_out), jnp.float32)
        b = scale * jax.random.normal(jax.random.fold_in(k, 1), (1, d_out),
                                      jnp.float32)
        return w, b

    wq, bq = lin(ks[0], dim_model, dim_model)
    wk, bk = lin(ks[1], dim_model, dim_model)
    wv, bv = lin(ks[2], dim_model, dim_model)
    wo, bo = lin(ks[3], dim_model, dim_model)
    w1, b1 = lin(ks[4], dim_model, hidden)
    w2, b2 = lin(ks[5], hidden, dim_model)
    g1 = jnp.ones((1, dim_model), jnp.float32)
    be1 = jnp.zeros((1, dim_model), jnp.float32)
    g2 = jnp.ones((1, dim_model), jnp.float32)
    be2 = jnp.zeros((1, dim_model), jnp.float32)
    return dict(wq=wq, bq=bq, wk=wk, bk=bk, wv=wv, bv=bv, wo=wo, bo=bo,
                w1=w1, b1=b1, w2=w2, b2=b2, g1=g1, be1=be1, g2=g2, be2=be2)


# ---------------------------------------------------------------------------
# One-time parameter prep (hoisted out of the forward path): QKV concat,
# bf16 casts for MXU operands.  Biases / LayerNorm params stay f32.
# ---------------------------------------------------------------------------
def prepare_encoder_params(params):
    p = params
    bf16 = jnp.bfloat16
    return dict(
        wqkv=jnp.concatenate([p['wq'], p['wk'], p['wv']], axis=1).astype(bf16),
        bqkv=jnp.concatenate([p['bq'], p['bk'], p['bv']], axis=1),
        wo=p['wo'].astype(bf16), bo=p['bo'],
        g1=p['g1'], be1=p['be1'],
        w1=p['w1'].astype(bf16), b1=p['b1'],
        w2=p['w2'].astype(bf16), b2=p['b2'],
        g2=p['g2'], be2=p['be2'],
    )


def _vmem_limit_bytes():
    # Generation-aware VMEM budget (v5e/v6e: 128 MiB physical, v7x: 64 MiB).
    try:
        cap = pltpu.get_tpu_info().vmem_capacity_bytes
    except Exception:
        cap = 64 * 1024 * 1024
    return int(min(cap * 3 // 4, 100 * 1024 * 1024))


# ---------------------------------------------------------------------------
# Encoder forward: one fused pallas_call.
# ---------------------------------------------------------------------------
def encoder_forward(x, prepared, num_head, eps=1e-5, batch_tile=None):
    B, S, D = x.shape
    assert D % num_head == 0
    assert S % num_head == 0, "kernel requires S % num_head == 0 (PyTorch view heads)"
    dh = D // num_head
    hidden = prepared['w1'].shape[1]

    if batch_tile is None:
        # Merge batch elements into fewer, bigger grid steps (amortizes the
        # ~0.35us per-step overhead on single-TC v5e/v6e) while keeping the
        # per-step activation footprint bounded.  On v7x, pass batch_tile=B//2
        # explicitly to keep 2 parallel steps for megacore sharding.
        budget = 4 << 20
        per_elem = 8 * S * max(3 * D, hidden) * 4
        batch_tile = 1
        for t in range(1, B + 1):
            if B % t == 0 and t * per_elem <= budget:
                batch_tile = t
    assert B % batch_tile == 0
    num_steps = B // batch_tile

    act_spec = pl.BlockSpec((batch_tile, S, D), lambda i: (i, 0, 0))
    # Untiled, single resident VMEM copy for all weights/biases (no pointless
    # double-buffering of constant blocks).
    resident = pl.BlockSpec(memory_space=pltpu.MemorySpace.VMEM)

    # Cost estimate for the per-head attention formulation.
    flops = B * (2 * S * D * 3 * D                       # QKV projection
                 + 4 * num_head * S * S * dh             # scores + P@V
                 + 2 * S * D * D                         # output projection
                 + 4 * S * D * hidden)                   # FFN
    transcendentals = B * (num_head * S * S + 4 * S)     # exp + LayerNorm rsqrt
    bytes_accessed = (2 * B * S * D * 4
                      + (3 * D * D + D * D + 2 * D * hidden) * 2
                      + (3 * D + D + hidden + 5 * D) * 4)

    kernel = functools.partial(encoder_kernel, num_head=num_head, eps=eps)
    out = pl.pallas_call(
        kernel,
        out_shape=jax.ShapeDtypeStruct((B, S, D), jnp.float32),
        grid=(num_steps,),
        in_specs=[act_spec] + [resident] * 12,
        out_specs=act_spec,
        compiler_params=pltpu.CompilerParams(
            dimension_semantics=("parallel",),
            vmem_limit_bytes=_vmem_limit_bytes()),
        cost_estimate=pl.CostEstimate(flops=flops,
                                      transcendentals=transcendentals,
                                      bytes_accessed=bytes_accessed),
    )(x, prepared['wqkv'], prepared['bqkv'], prepared['wo'], prepared['bo'],
      prepared['g1'], prepared['be1'], prepared['w1'], prepared['b1'],
      prepared['w2'], prepared['b2'], prepared['g2'], prepared['be2'])
    return out


# ---------------------------------------------------------------------------
# Pure-JAX f32 reference (mirrors the PyTorch forward exactly, incl. the
# no-transpose .view(B*H, -1, dh) head reshape).
# ---------------------------------------------------------------------------
def encoder_reference(x, params, num_head, eps=1e-5):
    B, S, D = x.shape
    dh = D // num_head
    p = params

    def ln(z, g, b):
        mu = jnp.mean(z, axis=-1, keepdims=True)
        var = jnp.mean((z - mu) ** 2, axis=-1, keepdims=True)
        return (z - mu) / jnp.sqrt(var + eps) * g[0] + b[0]

    q = x @ p['wq'] + p['bq'][0]
    k = x @ p['wk'] + p['bk'][0]
    v = x @ p['wv'] + p['bv'][0]
    qh = jnp.reshape(q, (B * num_head, -1, dh))
    kh = jnp.reshape(k, (B * num_head, -1, dh))
    vh = jnp.reshape(v, (B * num_head, -1, dh))
    att = jnp.einsum('bqd,bkd->bqk', qh, kh) * (dh ** -0.5)
    att = jax.nn.softmax(att, axis=-1)
    ctx = jnp.einsum('bqk,bkd->bqd', att, vh)
    ctx = jnp.reshape(ctx, (B, -1, dh * num_head))
    out = ln(ctx @ p['wo'] + p['bo'][0] + x, p['g1'], p['be1'])
    h = jax.nn.relu(out @ p['w1'] + p['b1'][0])
    out2 = ln(h @ p['w2'] + p['b2'][0] + out, p['g2'], p['be2'])
    return out2


if __name__ == "__main__":
    B, S = 2, 8
    dim_model, num_head, hidden = 32, 4, 64

    key = jax.random.PRNGKey(0)
    kx, kp = jax.random.split(key)
    x = jax.random.normal(kx, (B, S, dim_model), jnp.float32)
    params = init_encoder_params(kp, dim_model, num_head, hidden)
    prepared = prepare_encoder_params(params)          # one-time weight prep

    out = jax.block_until_ready(encoder_forward(x, prepared, num_head))
    ref = encoder_reference(x, params, num_head)

    assert out.shape == (B, S, dim_model)
    # bf16 MXU operands (f32 accumulate), exact softmax divide, f32 epilogues:
    # small drift vs. the pure-f32 reference, well inside 2e-2.
    assert jnp.allclose(out, ref, atol=2e-2, rtol=2e-2), "mismatch vs reference"

    print("KERNEL_OK")
</pallas_src>

<mosaic_0001>
module attributes {stable_mosaic.version = 11 : i64} {
  func.func @encoder_kernel(%arg0: i32, %arg1: memref<2x8x32xf32, #tpu.memory_space<vmem>>, %arg2: memref<32x96xbf16, #tpu.memory_space<vmem>>, %arg3: memref<1x96xf32, #tpu.memory_space<vmem>>, %arg4: memref<32x32xbf16, #tpu.memory_space<vmem>>, %arg5: memref<1x32xf32, #tpu.memory_space<vmem>>, %arg6: memref<1x32xf32, #tpu.memory_space<vmem>>, %arg7: memref<1x32xf32, #tpu.memory_space<vmem>>, %arg8: memref<32x64xbf16, #tpu.memory_space<vmem>>, %arg9: memref<1x64xf32, #tpu.memory_space<vmem>>, %arg10: memref<64x32xbf16, #tpu.memory_space<vmem>>, %arg11: memref<1x32xf32, #tpu.memory_space<vmem>>, %arg12: memref<1x32xf32, #tpu.memory_space<vmem>>, %arg13: memref<1x32xf32, #tpu.memory_space<vmem>>, %arg14: memref<2x8x32xf32, #tpu.memory_space<vmem>>) attributes {dimension_semantics = [#tpu.dimension_semantics<parallel>], iteration_bounds = array<i64: 1>, scalar_prefetch = 0 : i64, scratch_operands = 0 : i64, tpu.core_type = #tpu.core_type<tc>, window_params = [{transform_indices = @transform_0, window_bounds = array<i64: 2, 8, 32>}, {pipeline_mode = #tpu.pipeline_mode<synchronous>, transform_indices = @transform_1, window_bounds = array<i64: 32, 96>}, {pipeline_mode = #tpu.pipeline_mode<synchronous>, transform_indices = @transform_2, window_bounds = array<i64: 1, 96>}, {pipeline_mode = #tpu.pipeline_mode<synchronous>, transform_indices = @transform_3, window_bounds = array<i64: 32, 32>}, {pipeline_mode = #tpu.pipeline_mode<synchronous>, transform_indices = @transform_4, window_bounds = array<i64: 1, 32>}, {pipeline_mode = #tpu.pipeline_mode<synchronous>, transform_indices = @transform_5, window_bounds = array<i64: 1, 32>}, {pipeline_mode = #tpu.pipeline_mode<synchronous>, transform_indices = @transform_6, window_bounds = array<i64: 1, 32>}, {pipeline_mode = #tpu.pipeline_mode<synchronous>, transform_indices = @transform_7, window_bounds = array<i64: 32, 64>}, {pipeline_mode = #tpu.pipeline_mode<synchronous>, transform_indices = @transform_8, window_bounds = array<i64: 1, 64>}, {pipeline_mode = #tpu.pipeline_mode<synchronous>, transform_indices = @transform_9, window_bounds = array<i64: 64, 32>}, {pipeline_mode = #tpu.pipeline_mode<synchronous>, transform_indices = @transform_10, window_bounds = array<i64: 1, 32>}, {pipeline_mode = #tpu.pipeline_mode<synchronous>, transform_indices = @transform_11, window_bounds = array<i64: 1, 32>}, {pipeline_mode = #tpu.pipeline_mode<synchronous>, transform_indices = @transform_12, window_bounds = array<i64: 1, 32>}, {transform_indices = @transform_13, window_bounds = array<i64: 2, 8, 32>}]} {
    %c0 = arith.constant 0 : index
    %c0_0 = arith.constant 0 : index
    %0 = vector.load %arg2[%c0, %c0_0] : memref<32x96xbf16, #tpu.memory_space<vmem>>, vector<32x96xbf16>
    %c0_1 = arith.constant 0 : index
    %c0_2 = arith.constant 0 : index
    %1 = vector.load %arg3[%c0_1, %c0_2] : memref<1x96xf32, #tpu.memory_space<vmem>>, vector<1x96xf32>
    %c0_3 = arith.constant 0 : index
    %c0_4 = arith.constant 0 : index
    %2 = vector.load %arg4[%c0_3, %c0_4] : memref<32x32xbf16, #tpu.memory_space<vmem>>, vector<32x32xbf16>
    %c0_5 = arith.constant 0 : index
    %c0_6 = arith.constant 0 : index
    %3 = vector.load %arg5[%c0_5, %c0_6] : memref<1x32xf32, #tpu.memory_space<vmem>>, vector<1x32xf32>
    %c0_7 = arith.constant 0 : index
    %c0_8 = arith.constant 0 : index
    %4 = vector.load %arg6[%c0_7, %c0_8] : memref<1x32xf32, #tpu.memory_space<vmem>>, vector<1x32xf32>
    %c0_9 = arith.constant 0 : index
    %c0_10 = arith.constant 0 : index
    %5 = vector.load %arg7[%c0_9, %c0_10] : memref<1x32xf32, #tpu.memory_space<vmem>>, vector<1x32xf32>
    %c0_11 = arith.constant 0 : index
    %c0_12 = arith.constant 0 : index
    %6 = vector.load %arg8[%c0_11, %c0_12] : memref<32x64xbf16, #tpu.memory_space<vmem>>, vector<32x64xbf16>
    %c0_13 = arith.constant 0 : index
    %c0_14 = arith.constant 0 : index
    %7 = vector.load %arg9[%c0_13, %c0_14] : memref<1x64xf32, #tpu.memory_space<vmem>>, vector<1x64xf32>
    %c0_15 = arith.constant 0 : index
    %c0_16 = arith.constant 0 : index
    %8 = vector.load %arg10[%c0_15, %c0_16] : memref<64x32xbf16, #tpu.memory_space<vmem>>, vector<64x32xbf16>
    %c0_17 = arith.constant 0 : index
    %c0_18 = arith.constant 0 : index
    %9 = vector.load %arg11[%c0_17, %c0_18] : memref<1x32xf32, #tpu.memory_space<vmem>>, vector<1x32xf32>
    %c0_19 = arith.constant 0 : index
    %c0_20 = arith.constant 0 : index
    %10 = vector.load %arg12[%c0_19, %c0_20] : memref<1x32xf32, #tpu.memory_space<vmem>>, vector<1x32xf32>
    %c0_21 = arith.constant 0 : index
    %c0_22 = arith.constant 0 : index
    %11 = vector.load %arg13[%c0_21, %c0_22] : memref<1x32xf32, #tpu.memory_space<vmem>>, vector<1x32xf32>
    %c0_23 = arith.constant 0 : index
    %c0_24 = arith.constant 0 : index
    %c0_25 = arith.constant 0 : index
    %12 = vector.load %arg1[%c0_23, %c0_24, %c0_25] : memref<2x8x32xf32, #tpu.memory_space<vmem>>, vector<1x8x32xf32>
    %13 = vector.shape_cast %12 : vector<1x8x32xf32> to vector<8x32xf32>
    %14 = arith.truncf %13 : vector<8x32xf32> to vector<8x32xbf16>
    %cst = arith.constant dense<0.000000e+00> : vector<8x96xf32>
    %15 = tpu.matmul %14, %0, %cst {dimension_numbers = #tpu.dot_dimension_numbers<[1], [0], [0], [1], [0, 0, 1, 1], [], []>} : vector<8x32xbf16>, vector<32x96xbf16>, vector<8x96xf32> -> vector<8x96xf32>
    %16 = vector.broadcast %1 : vector<1x96xf32> to vector<8x96xf32>
    %17 = arith.addf %15, %16 : vector<8x96xf32>
    %18 = vector.extract_strided_slice %17 {offsets = [0, 0], sizes = [8, 32], strides = [1, 1]} : vector<8x96xf32> to vector<8x32xf32>
    %19 = vector.extract_strided_slice %18 {offsets = [0, 0], sizes = [8, 8], strides = [1, 1]} : vector<8x32xf32> to vector<8x8xf32>
    %20 = vector.extract_strided_slice %18 {offsets = [0, 8], sizes = [8, 8], strides = [1, 1]} : vector<8x32xf32> to vector<8x8xf32>
    %21 = vector.extract_strided_slice %18 {offsets = [0, 16], sizes = [8, 8], strides = [1, 1]} : vector<8x32xf32> to vector<8x8xf32>
    %22 = vector.extract_strided_slice %18 {offsets = [0, 24], sizes = [8, 8], strides = [1, 1]} : vector<8x32xf32> to vector<8x8xf32>
    %23 = vector.extract_strided_slice %19 {offsets = [0, 0], sizes = [2, 8], strides = [1, 1]} : vector<8x8xf32> to vector<2x8xf32>
    %24 = vector.extract_strided_slice %20 {offsets = [0, 0], sizes = [2, 8], strides = [1, 1]} : vector<8x8xf32> to vector<2x8xf32>
    %25 = vector.extract_strided_slice %21 {offsets = [0, 0], sizes = [2, 8], strides = [1, 1]} : vector<8x8xf32> to vector<2x8xf32>
    %26 = vector.extract_strided_slice %22 {offsets = [0, 0], sizes = [2, 8], strides = [1, 1]} : vector<8x8xf32> to vector<2x8xf32>
    %27 = tpu.concatenate %23, %24, %25, %26 in 0 : vector<2x8xf32>, vector<2x8xf32>, vector<2x8xf32>, vector<2x8xf32> -> vector<8x8xf32>
    %28 = vector.extract_strided_slice %19 {offsets = [2, 0], sizes = [2, 8], strides = [1, 1]} : vector<8x8xf32> to vector<2x8xf32>
    %29 = vector.extract_strided_slice %20 {offsets = [2, 0], sizes = [2, 8], strides = [1, 1]} : vector<8x8xf32> to vector<2x8xf32>
    %30 = vector.extract_strided_slice %21 {offsets = [2, 0], sizes = [2, 8], strides = [1, 1]} : vector<8x8xf32> to vector<2x8xf32>
    %31 = vector.extract_strided_slice %22 {offsets = [2, 0], sizes = [2, 8], strides = [1, 1]} : vector<8x8xf32> to vector<2x8xf32>
    %32 = tpu.concatenate %28, %29, %30, %31 in 0 : vector<2x8xf32>, vector<2x8xf32>, vector<2x8xf32>, vector<2x8xf32> -> vector<8x8xf32>
    %33 = vector.extract_strided_slice %19 {offsets = [4, 0], sizes = [2, 8], strides = [1, 1]} : vector<8x8xf32> to vector<2x8xf32>
    %34 = vector.extract_strided_slice %20 {offsets = [4, 0], sizes = [2, 8], strides = [1, 1]} : vector<8x8xf32> to vector<2x8xf32>
    %35 = vector.extract_strided_slice %21 {offsets = [4, 0], sizes = [2, 8], strides = [1, 1]} : vector<8x8xf32> to vector<2x8xf32>
    %36 = vector.extract_strided_slice %22 {offsets = [4, 0], sizes = [2, 8], strides = [1, 1]} : vector<8x8xf32> to vector<2x8xf32>
    %37 = tpu.concatenate %33, %34, %35, %36 in 0 : vector<2x8xf32>, vector<2x8xf32>, vector<2x8xf32>, vector<2x8xf32> -> vector<8x8xf32>
    %38 = vector.extract_strided_slice %19 {offsets = [6, 0], sizes = [2, 8], strides = [1, 1]} : vector<8x8xf32> to vector<2x8xf32>
    %39 = vector.extract_strided_slice %20 {offsets = [6, 0], sizes = [2, 8], strides = [1, 1]} : vector<8x8xf32> to vector<2x8xf32>
    %40 = vector.extract_strided_slice %21 {offsets = [6, 0], sizes = [2, 8], strides = [1, 1]} : vector<8x8xf32> to vector<2x8xf32>
    %41 = vector.extract_strided_slice %22 {offsets = [6, 0], sizes = [2, 8], strides = [1, 1]} : vector<8x8xf32> to vector<2x8xf32>
    %42 = tpu.concatenate %38, %39, %40, %41 in 0 : vector<2x8xf32>, vector<2x8xf32>, vector<2x8xf32>, vector<2x8xf32> -> vector<8x8xf32>
    %43 = vector.shape_cast %27 : vector<8x8xf32> to vector<1x8x8xf32>
    %44 = vector.shape_cast %32 : vector<8x8xf32> to vector<1x8x8xf32>
    %45 = vector.shape_cast %37 : vector<8x8xf32> to vector<1x8x8xf32>
    %46 = vector.shape_cast %42 : vector<8x8xf32> to vector<1x8x8xf32>
    %47 = tpu.concatenate %43, %44, %45, %46 in 0 : vector<1x8x8xf32>, vector<1x8x8xf32>, vector<1x8x8xf32>, vector<1x8x8xf32> -> vector<4x8x8xf32>
    %48 = arith.truncf %47 : vector<4x8x8xf32> to vector<4x8x8xbf16>
    %49 = vector.extract_strided_slice %17 {offsets = [0, 32], sizes = [8, 32], strides = [1, 1]} : vector<8x96xf32> to vector<8x32xf32>
    %50 = vector.extract_strided_slice %49 {offsets = [0, 0], sizes = [8, 8], strides = [1, 1]} : vector<8x32xf32> to vector<8x8xf32>
    %51 = vector.extract_strided_slice %49 {offsets = [0, 8], sizes = [8, 8], strides = [1, 1]} : vector<8x32xf32> to vector<8x8xf32>
    %52 = vector.extract_strided_slice %49 {offsets = [0, 16], sizes = [8, 8], strides = [1, 1]} : vector<8x32xf32> to vector<8x8xf32>
    %53 = vector.extract_strided_slice %49 {offsets = [0, 24], sizes = [8, 8], strides = [1, 1]} : vector<8x32xf32> to vector<8x8xf32>
    %54 = vector.extract_strided_slice %50 {offsets = [0, 0], sizes = [2, 8], strides = [1, 1]} : vector<8x8xf32> to vector<2x8xf32>
    %55 = vector.extract_strided_slice %51 {offsets = [0, 0], sizes = [2, 8], strides = [1, 1]} : vector<8x8xf32> to vector<2x8xf32>
    %56 = vector.extract_strided_slice %52 {offsets = [0, 0], sizes = [2, 8], strides = [1, 1]} : vector<8x8xf32> to vector<2x8xf32>
    %57 = vector.extract_strided_slice %53 {offsets = [0, 0], sizes = [2, 8], strides = [1, 1]} : vector<8x8xf32> to vector<2x8xf32>
    %58 = tpu.concatenate %54, %55, %56, %57 in 0 : vector<2x8xf32>, vector<2x8xf32>, vector<2x8xf32>, vector<2x8xf32> -> vector<8x8xf32>
    %59 = vector.extract_strided_slice %50 {offsets = [2, 0], sizes = [2, 8], strides = [1, 1]} : vector<8x8xf32> to vector<2x8xf32>
    %60 = vector.extract_strided_slice %51 {offsets = [2, 0], sizes = [2, 8], strides = [1, 1]} : vector<8x8xf32> to vector<2x8xf32>
    %61 = vector.extract_strided_slice %52 {offsets = [2, 0], sizes = [2, 8], strides = [1, 1]} : vector<8x8xf32> to vector<2x8xf32>
    %62 = vector.extract_strided_slice %53 {offsets = [2, 0], sizes = [2, 8], strides = [1, 1]} : vector<8x8xf32> to vector<2x8xf32>
    %63 = tpu.concatenate %59, %60, %61, %62 in 0 : vector<2x8xf32>, vector<2x8xf32>, vector<2x8xf32>, vector<2x8xf32> -> vector<8x8xf32>
    %64 = vector.extract_strided_slice %50 {offsets = [4, 0], sizes = [2, 8], strides = [1, 1]} : vector<8x8xf32> to vector<2x8xf32>
    %65 = vector.extract_strided_slice %51 {offsets = [4, 0], sizes = [2, 8], strides = [1, 1]} : vector<8x8xf32> to vector<2x8xf32>
    %66 = vector.extract_strided_slice %52 {offsets = [4, 0], sizes = [2, 8], strides = [1, 1]} : vector<8x8xf32> to vector<2x8xf32>
    %67 = vector.extract_strided_slice %53 {offsets = [4, 0], sizes = [2, 8], strides = [1, 1]} : vector<8x8xf32> to vector<2x8xf32>
    %68 = tpu.concatenate %64, %65, %66, %67 in 0 : vector<2x8xf32>, vector<2x8xf32>, vector<2x8xf32>, vector<2x8xf32> -> vector<8x8xf32>
    %69 = vector.extract_strided_slice %50 {offsets = [6, 0], sizes = [2, 8], strides = [1, 1]} : vector<8x8xf32> to vector<2x8xf32>
    %70 = vector.extract_strided_slice %51 {offsets = [6, 0], sizes = [2, 8], strides = [1, 1]} : vector<8x8xf32> to vector<2x8xf32>
    %71 = vector.extract_strided_slice %52 {offsets = [6, 0], sizes = [2, 8], strides = [1, 1]} : vector<8x8xf32> to vector<2x8xf32>
    %72 = vector.extract_strided_slice %53 {offsets = [6, 0], sizes = [2, 8], strides = [1, 1]} : vector<8x8xf32> to vector<2x8xf32>
    %73 = tpu.concatenate %69, %70, %71, %72 in 0 : vector<2x8xf32>, vector<2x8xf32>, vector<2x8xf32>, vector<2x8xf32> -> vector<8x8xf32>
    %74 = vector.shape_cast %58 : vector<8x8xf32> to vector<1x8x8xf32>
    %75 = vector.shape_cast %63 : vector<8x8xf32> to vector<1x8x8xf32>
    %76 = vector.shape_cast %68 : vector<8x8xf32> to vector<1x8x8xf32>
    %77 = vector.shape_cast %73 : vector<8x8xf32> to vector<1x8x8xf32>
    %78 = tpu.concatenate %74, %75, %76, %77 in 0 : vector<1x8x8xf32>, vector<1x8x8xf32>, vector<1x8x8xf32>, vector<1x8x8xf32> -> vector<4x8x8xf32>
    %79 = arith.truncf %78 : vector<4x8x8xf32> to vector<4x8x8xbf16>
    %80 = vector.extract_strided_slice %17 {offsets = [0, 64], sizes = [8, 32], strides = [1, 1]} : vector<8x96xf32> to vector<8x32xf32>
    %81 = vector.extract_strided_slice %80 {offsets = [0, 0], sizes = [8, 8], strides = [1, 1]} : vector<8x32xf32> to vector<8x8xf32>
    %82 = vector.extract_strided_slice %80 {offsets = [0, 8], sizes = [8, 8], strides = [1, 1]} : vector<8x32xf32> to vector<8x8xf32>
    %83 = vector.extract_strided_slice %80 {offsets = [0, 16], sizes = [8, 8], strides = [1, 1]} : vector<8x32xf32> to vector<8x8xf32>
    %84 = vector.extract_strided_slice %80 {offsets = [0, 24], sizes = [8, 8], strides = [1, 1]} : vector<8x32xf32> to vector<8x8xf32>
    %85 = vector.extract_strided_slice %81 {offsets = [0, 0], sizes = [2, 8], strides = [1, 1]} : vector<8x8xf32> to vector<2x8xf32>
    %86 = vector.extract_strided_slice %82 {offsets = [0, 0], sizes = [2, 8], strides = [1, 1]} : vector<8x8xf32> to vector<2x8xf32>
    %87 = vector.extract_strided_slice %83 {offsets = [0, 0], sizes = [2, 8], strides = [1, 1]} : vector<8x8xf32> to vector<2x8xf32>
    %88 = vector.extract_strided_slice %84 {offsets = [0, 0], sizes = [2, 8], strides = [1, 1]} : vector<8x8xf32> to vector<2x8xf32>
    %89 = tpu.concatenate %85, %86, %87, %88 in 0 : vector<2x8xf32>, vector<2x8xf32>, vector<2x8xf32>, vector<2x8xf32> -> vector<8x8xf32>
    %90 = vector.extract_strided_slice %81 {offsets = [2, 0], sizes = [2, 8], strides = [1, 1]} : vector<8x8xf32> to vector<2x8xf32>
    %91 = vector.extract_strided_slice %82 {offsets = [2, 0], sizes = [2, 8], strides = [1, 1]} : vector<8x8xf32> to vector<2x8xf32>
    %92 = vector.extract_strided_slice %83 {offsets = [2, 0], sizes = [2, 8], strides = [1, 1]} : vector<8x8xf32> to vector<2x8xf32>
    %93 = vector.extract_strided_slice %84 {offsets = [2, 0], sizes = [2, 8], strides = [1, 1]} : vector<8x8xf32> to vector<2x8xf32>
    %94 = tpu.concatenate %90, %91, %92, %93 in 0 : vector<2x8xf32>, vector<2x8xf32>, vector<2x8xf32>, vector<2x8xf32> -> vector<8x8xf32>
    %95 = vector.extract_strided_slice %81 {offsets = [4, 0], sizes = [2, 8], strides = [1, 1]} : vector<8x8xf32> to vector<2x8xf32>
    %96 = vector.extract_strided_slice %82 {offsets = [4, 0], sizes = [2, 8], strides = [1, 1]} : vector<8x8xf32> to vector<2x8xf32>
    %97 = vector.extract_strided_slice %83 {offsets = [4, 0], sizes = [2, 8], strides = [1, 1]} : vector<8x8xf32> to vector<2x8xf32>
    %98 = vector.extract_strided_slice %84 {offsets = [4, 0], sizes = [2, 8], strides = [1, 1]} : vector<8x8xf32> to vector<2x8xf32>
    %99 = tpu.concatenate %95, %96, %97, %98 in 0 : vector<2x8xf32>, vector<2x8xf32>, vector<2x8xf32>, vector<2x8xf32> -> vector<8x8xf32>
    %100 = vector.extract_strided_slice %81 {offsets = [6, 0], sizes = [2, 8], strides = [1, 1]} : vector<8x8xf32> to vector<2x8xf32>
    %101 = vector.extract_strided_slice %82 {offsets = [6, 0], sizes = [2, 8], strides = [1, 1]} : vector<8x8xf32> to vector<2x8xf32>
    %102 = vector.extract_strided_slice %83 {offsets = [6, 0], sizes = [2, 8], strides = [1, 1]} : vector<8x8xf32> to vector<2x8xf32>
    %103 = vector.extract_strided_slice %84 {offsets = [6, 0], sizes = [2, 8], strides = [1, 1]} : vector<8x8xf32> to vector<2x8xf32>
    %104 = tpu.concatenate %100, %101, %102, %103 in 0 : vector<2x8xf32>, vector<2x8xf32>, vector<2x8xf32>, vector<2x8xf32> -> vector<8x8xf32>
    %105 = vector.shape_cast %89 : vector<8x8xf32> to vector<1x8x8xf32>
    %106 = vector.shape_cast %94 : vector<8x8xf32> to vector<1x8x8xf32>
    %107 = vector.shape_cast %99 : vector<8x8xf32> to vector<1x8x8xf32>
    %108 = vector.shape_cast %104 : vector<8x8xf32> to vector<1x8x8xf32>
    %109 = tpu.concatenate %105, %106, %107, %108 in 0 : vector<1x8x8xf32>, vector<1x8x8xf32>, vector<1x8x8xf32>, vector<1x8x8xf32> -> vector<4x8x8xf32>
    %110 = arith.truncf %109 : vector<4x8x8xf32> to vector<4x8x8xbf16>
    "tpu.trace_start"() <{level = 10 : i32, message = "hqe,hke->hqk"}> : () -> ()
    %cst_26 = arith.constant dense<0.000000e+00> : vector<4x8x8xf32>
    %111 = tpu.matmul %48, %79, %cst_26 {dimension_numbers = #tpu.dot_dimension_numbers<[2], [2], [1], [1], [0, 0, 0, 1, 1, 1], [0], [0]>} : vector<4x8x8xbf16>, vector<4x8x8xbf16>, vector<4x8x8xf32> -> vector<4x8x8xf32>
    "tpu.trace_stop"() : () -> ()
    %cst_27 = arith.constant 0.353553385 : f32
    %112 = vector.broadcast %cst_27 : f32 to vector<4x8x8xf32>
    %113 = arith.mulf %111, %112 : vector<4x8x8xf32>
    %cst_28 = arith.constant dense<0xFF800000> : vector<4x8xf32>
    %114 = vector.multi_reduction <maximumf>, %113, %cst_28 [2] : vector<4x8x8xf32> to vector<4x8xf32>
    %115 = vector.shape_cast %114 : vector<4x8xf32> to vector<4x8x1xf32>
    %116 = vector.broadcast %115 : vector<4x8x1xf32> to vector<4x8x8xf32>
    %117 = arith.subf %113, %116 : vector<4x8x8xf32>
    %118 = math.exp %117 : vector<4x8x8xf32>
    %cst_29 = arith.constant dense<0.000000e+00> : vector<4x8xf32>
    %119 = vector.multi_reduction <add>, %118, %cst_29 [2] : vector<4x8x8xf32> to vector<4x8xf32>
    %120 = vector.shape_cast %119 : vector<4x8xf32> to vector<4x8x1xf32>
    %121 = vector.broadcast %120 : vector<4x8x1xf32> to vector<4x8x8xf32>
    %122 = arith.divf %118, %121 : vector<4x8x8xf32>
    %123 = arith.truncf %122 : vector<4x8x8xf32> to vector<4x8x8xbf16>
    "tpu.trace_start"() <{level = 10 : i32, message = "hqk,hke->hqe"}> : () -> ()
    %cst_30 = arith.constant dense<0.000000e+00> : vector<4x8x8xf32>
    %124 = tpu.matmul %123, %110, %cst_30 {dimension_numbers = #tpu.dot_dimension_numbers<[2], [1], [1], [2], [0, 0, 0, 1, 1, 2], [0], [0]>} : vector<4x8x8xbf16>, vector<4x8x8xbf16>, vector<4x8x8xf32> -> vector<4x8x8xf32>
    "tpu.trace_stop"() : () -> ()
    %125 = vector.extract_strided_slice %124 {offsets = [0, 0, 0], sizes = [1, 2, 8], strides = [1, 1, 1]} : vector<4x8x8xf32> to vector<1x2x8xf32>
    %126 = vector.shape_cast %125 : vector<1x2x8xf32> to vector<2x8xf32>
    %127 = vector.extract_strided_slice %124 {offsets = [0, 2, 0], sizes = [1, 2, 8], strides = [1, 1, 1]} : vector<4x8x8xf32> to vector<1x2x8xf32>
    %128 = vector.shape_cast %127 : vector<1x2x8xf32> to vector<2x8xf32>
    %129 = vector.extract_strided_slice %124 {offsets = [0, 4, 0], sizes = [1, 2, 8], strides = [1, 1, 1]} : vector<4x8x8xf32> to vector<1x2x8xf32>
    %130 = vector.shape_cast %129 : vector<1x2x8xf32> to vector<2x8xf32>
    %131 = vector.extract_strided_slice %124 {offsets = [0, 6, 0], sizes = [1, 2, 8], strides = [1, 1, 1]} : vector<4x8x8xf32> to vector<1x2x8xf32>
    %132 = vector.shape_cast %131 : vector<1x2x8xf32> to vector<2x8xf32>
    %133 = tpu.concatenate %126, %128, %130, %132 in 1 : vector<2x8xf32>, vector<2x8xf32>, vector<2x8xf32>, vector<2x8xf32> -> vector<2x32xf32>
    %134 = vector.extract_strided_slice %124 {offsets = [1, 0, 0], sizes = [1, 2, 8], strides = [1, 1, 1]} : vector<4x8x8xf32> to vector<1x2x8xf32>
    %135 = vector.shape_cast %134 : vector<1x2x8xf32> to vector<2x8xf32>
    %136 = vector.extract_strided_slice %124 {offsets = [1, 2, 0], sizes = [1, 2, 8], strides = [1, 1, 1]} : vector<4x8x8xf32> to vector<1x2x8xf32>
    %137 = vector.shape_cast %136 : vector<1x2x8xf32> to vector<2x8xf32>
    %138 = vector.extract_strided_slice %124 {offsets = [1, 4, 0], sizes = [1, 2, 8], strides = [1, 1, 1]} : vector<4x8x8xf32> to vector<1x2x8xf32>
    %139 = vector.shape_cast %138 : vector<1x2x8xf32> to vector<2x8xf32>
    %140 = vector.extract_strided_slice %124 {offsets = [1, 6, 0], sizes = [1, 2, 8], strides = [1, 1, 1]} : vector<4x8x8xf32> to vector<1x2x8xf32>
    %141 = vector.shape_cast %140 : vector<1x2x8xf32> to vector<2x8xf32>
    %142 = tpu.concatenate %135, %137, %139, %141 in 1 : vector<2x8xf32>, vector<2x8xf32>, vector<2x8xf32>, vector<2x8xf32> -> vector<2x32xf32>
    %143 = vector.extract_strided_slice %124 {offsets = [2, 0, 0], sizes = [1, 2, 8], strides = [1, 1, 1]} : vector<4x8x8xf32> to vector<1x2x8xf32>
    %144 = vector.shape_cast %143 : vector<1x2x8xf32> to vector<2x8xf32>
    %145 = vector.extract_strided_slice %124 {offsets = [2, 2, 0], sizes = [1, 2, 8], strides = [1, 1, 1]} : vector<4x8x8xf32> to vector<1x2x8xf32>
    %146 = vector.shape_cast %145 : vector<1x2x8xf32> to vector<2x8xf32>
    %147 = vector.extract_strided_slice %124 {offsets = [2, 4, 0], sizes = [1, 2, 8], strides = [1, 1, 1]} : vector<4x8x8xf32> to vector<1x2x8xf32>
    %148 = vector.shape_cast %147 : vector<1x2x8xf32> to vector<2x8xf32>
    %149 = vector.extract_strided_slice %124 {offsets = [2, 6, 0], sizes = [1, 2, 8], strides = [1, 1, 1]} : vector<4x8x8xf32> to vector<1x2x8xf32>
    %150 = vector.shape_cast %149 : vector<1x2x8xf32> to vector<2x8xf32>
    %151 = tpu.concatenate %144, %146, %148, %150 in 1 : vector<2x8xf32>, vector<2x8xf32>, vector<2x8xf32>, vector<2x8xf32> -> vector<2x32xf32>
    %152 = vector.extract_strided_slice %124 {offsets = [3, 0, 0], sizes = [1, 2, 8], strides = [1, 1, 1]} : vector<4x8x8xf32> to vector<1x2x8xf32>
    %153 = vector.shape_cast %152 : vector<1x2x8xf32> to vector<2x8xf32>
    %154 = vector.extract_strided_slice %124 {offsets = [3, 2, 0], sizes = [1, 2, 8], strides = [1, 1, 1]} : vector<4x8x8xf32> to vector<1x2x8xf32>
    %155 = vector.shape_cast %154 : vector<1x2x8xf32> to vector<2x8xf32>
    %156 = vector.extract_strided_slice %124 {offsets = [3, 4, 0], sizes = [1, 2, 8], strides = [1, 1, 1]} : vector<4x8x8xf32> to vector<1x2x8xf32>
    %157 = vector.shape_cast %156 : vector<1x2x8xf32> to vector<2x8xf32>
    %158 = vector.extract_strided_slice %124 {offsets = [3, 6, 0], sizes = [1, 2, 8], strides = [1, 1, 1]} : vector<4x8x8xf32> to vector<1x2x8xf32>
    %159 = vector.shape_cast %158 : vector<1x2x8xf32> to vector<2x8xf32>
    %160 = tpu.concatenate %153, %155, %157, %159 in 1 : vector<2x8xf32>, vector<2x8xf32>, vector<2x8xf32>, vector<2x8xf32> -> vector<2x32xf32>
    %161 = tpu.concatenate %133, %142, %151, %160 in 0 : vector<2x32xf32>, vector<2x32xf32>, vector<2x32xf32>, vector<2x32xf32> -> vector<8x32xf32>
    %162 = vector.broadcast %3 : vector<1x32xf32> to vector<8x32xf32>
    %163 = arith.addf %13, %162 : vector<8x32xf32>
    %164 = arith.truncf %161 : vector<8x32xf32> to vector<8x32xbf16>
    %cst_31 = arith.constant dense<0.000000e+00> : vector<8x32xf32>
    %165 = tpu.matmul %164, %2, %cst_31 {dimension_numbers = #tpu.dot_dimension_numbers<[1], [0], [0], [1], [0, 0, 1, 1], [], []>} : vector<8x32xbf16>, vector<32x32xbf16>, vector<8x32xf32> -> vector<8x32xf32>
    %166 = arith.addf %163, %165 : vector<8x32xf32>
    %cst_32 = arith.constant dense<0.000000e+00> : vector<8xf32>
    %167 = vector.multi_reduction <add>, %166, %cst_32 [1] : vector<8x32xf32> to vector<8xf32>
    %168 = vector.shape_cast %167 : vector<8xf32> to vector<8x1xf32>
    %cst_33 = arith.constant 3.200000e+01 : f32
    %169 = vector.broadcast %cst_33 : f32 to vector<8x1xf32>
    %170 = arith.divf %168, %169 : vector<8x1xf32>
    %171 = vector.broadcast %170 : vector<8x1xf32> to vector<8x32xf32>
    %172 = arith.subf %166, %171 : vector<8x32xf32>
    %173 = arith.mulf %172, %172 : vector<8x32xf32>
    %cst_34 = arith.constant dense<0.000000e+00> : vector<8xf32>
    %174 = vector.multi_reduction <add>, %173, %cst_34 [1] : vector<8x32xf32> to vector<8xf32>
    %175 = vector.shape_cast %174 : vector<8xf32> to vector<8x1xf32>
    %cst_35 = arith.constant 3.200000e+01 : f32
    %176 = vector.broadcast %cst_35 : f32 to vector<8x1xf32>
    %177 = arith.divf %175, %176 : vector<8x1xf32>
    %178 = vector.broadcast %170 : vector<8x1xf32> to vector<8x32xf32>
    %179 = arith.subf %166, %178 : vector<8x32xf32>
    %cst_36 = arith.constant 9.99999974E-6 : f32
    %180 = vector.broadcast %cst_36 : f32 to vector<8x1xf32>
    %181 = arith.addf %177, %180 : vector<8x1xf32>
    %182 = math.rsqrt %181 : vector<8x1xf32>
    %183 = vector.broadcast %182 : vector<8x1xf32> to vector<8x32xf32>
    %184 = arith.mulf %179, %183 : vector<8x32xf32>
    %185 = vector.broadcast %4 : vector<1x32xf32> to vector<8x32xf32>
    %186 = arith.mulf %184, %185 : vector<8x32xf32>
    %187 = vector.broadcast %5 : vector<1x32xf32> to vector<8x32xf32>
    %188 = arith.addf %186, %187 : vector<8x32xf32>
    %189 = arith.truncf %188 : vector<8x32xf32> to vector<8x32xbf16>
    %cst_37 = arith.constant dense<0.000000e+00> : vector<8x64xf32>
    %190 = tpu.matmul %189, %6, %cst_37 {dimension_numbers = #tpu.dot_dimension_numbers<[1], [0], [0], [1], [0, 0, 1, 1], [], []>} : vector<8x32xbf16>, vector<32x64xbf16>, vector<8x64xf32> -> vector<8x64xf32>
    %191 = vector.broadcast %7 : vector<1x64xf32> to vector<8x64xf32>
    %192 = arith.addf %190, %191 : vector<8x64xf32>
    %cst_38 = arith.constant 0.000000e+00 : f32
    %193 = vector.broadcast %cst_38 : f32 to vector<8x64xf32>
    %194 = arith.maximumf %192, %193 : vector<8x64xf32>
    %195 = arith.truncf %194 : vector<8x64xf32> to vector<8x64xbf16>
    %cst_39 = arith.constant dense<0.000000e+00> : vector<8x32xf32>
    %196 = tpu.matmul %195, %8, %cst_39 {dimension_numbers = #tpu.dot_dimension_numbers<[1], [0], [0], [1], [0, 0, 1, 1], [], []>} : vector<8x64xbf16>, vector<64x32xbf16>, vector<8x32xf32> -> vector<8x32xf32>
    %197 = vector.broadcast %9 : vector<1x32xf32> to vector<8x32xf32>
    %198 = arith.addf %196, %197 : vector<8x32xf32>
    %199 = arith.addf %198, %188 : vector<8x32xf32>
    %cst_40 = arith.constant dense<0.000000e+00> : vector<8xf32>
    %200 = vector.multi_reduction <add>, %199, %cst_40 [1] : vector<8x32xf32> to vector<8xf32>
    %201 = vector.shape_cast %200 : vector<8xf32> to vector<8x1xf32>
    %cst_41 = arith.constant 3.200000e+01 : f32
    %202 = vector.broadcast %cst_41 : f32 to vector<8x1xf32>
    %203 = arith.divf %201, %202 : vector<8x1xf32>
    %204 = vector.broadcast %203 : vector<8x1xf32> to vector<8x32xf32>
    %205 = arith.subf %199, %204 : vector<8x32xf32>
    %206 = arith.mulf %205, %205 : vector<8x32xf32>
    %cst_42 = arith.constant dense<0.000000e+00> : vector<8xf32>
    %207 = vector.multi_reduction <add>, %206, %cst_42 [1] : vector<8x32xf32> to vector<8xf32>
    %208 = vector.shape_cast %207 : vector<8xf32> to vector<8x1xf32>
    %cst_43 = arith.constant 3.200000e+01 : f32
    %209 = vector.broadcast %cst_43 : f32 to vector<8x1xf32>
    %210 = arith.divf %208, %209 : vector<8x1xf32>
    %211 = vector.broadcast %203 : vector<8x1xf32> to vector<8x32xf32>
    %212 = arith.subf %199, %211 : vector<8x32xf32>
    %cst_44 = arith.constant 9.99999974E-6 : f32
    %213 = vector.broadcast %cst_44 : f32 to vector<8x1xf32>
    %214 = arith.addf %210, %213 : vector<8x1xf32>
    %215 = math.rsqrt %214 : vector<8x1xf32>
    %216 = vector.broadcast %215 : vector<8x1xf32> to vector<8x32xf32>
    %217 = arith.mulf %212, %216 : vector<8x32xf32>
    %218 = vector.broadcast %10 : vector<1x32xf32> to vector<8x32xf32>
    %219 = arith.mulf %217, %218 : vector<8x32xf32>
    %220 = vector.broadcast %11 : vector<1x32xf32> to vector<8x32xf32>
    %221 = arith.addf %219, %220 : vector<8x32xf32>
    %c0_45 = arith.constant 0 : index
    %c0_46 = arith.constant 0 : index
    %c0_47 = arith.constant 0 : index
    %222 = vector.load %arg14[%c0_45, %c0_46, %c0_47] : memref<2x8x32xf32, #tpu.memory_space<vmem>>, vector<1x8x32xf32>
    %223 = vector.shape_cast %222 : vector<1x8x32xf32> to vector<8x32xf32>
    %224 = vector.shape_cast %221 : vector<8x32xf32> to vector<1x8x32xf32>
    tpu.vector_store %arg14[%c0_45, %c0_46, %c0_47], %224 {strides = array<i32>} : memref<2x8x32xf32, #tpu.memory_space<vmem>>, vector<1x8x32xf32>,
    %c1 = arith.constant 1 : index
    %c0_48 = arith.constant 0 : index
    %c0_49 = arith.constant 0 : index
    %225 = vector.load %arg1[%c1, %c0_48, %c0_49] : memref<2x8x32xf32, #tpu.memory_space<vmem>>, vector<1x8x32xf32>
    %226 = vector.shape_cast %225 : vector<1x8x32xf32> to vector<8x32xf32>
    %227 = arith.truncf %226 : vector<8x32xf32> to vector<8x32xbf16>
    %cst_50 = arith.constant dense<0.000000e+00> : vector<8x96xf32>
    %228 = tpu.matmul %227, %0, %cst_50 {dimension_numbers = #tpu.dot_dimension_numbers<[1], [0], [0], [1], [0, 0, 1, 1], [], []>} : vector<8x32xbf16>, vector<32x96xbf16>, vector<8x96xf32> -> vector<8x96xf32>
    %229 = vector.broadcast %1 : vector<1x96xf32> to vector<8x96xf32>
    %230 = arith.addf %228, %229 : vector<8x96xf32>
    %231 = vector.extract_strided_slice %230 {offsets = [0, 0], sizes = [8, 32], strides = [1, 1]} : vector<8x96xf32> to vector<8x32xf32>
    %232 = vector.extract_strided_slice %231 {offsets = [0, 0], sizes = [8, 8], strides = [1, 1]} : vector<8x32xf32> to vector<8x8xf32>
    %233 = vector.extract_strided_slice %231 {offsets = [0, 8], sizes = [8, 8], strides = [1, 1]} : vector<8x32xf32> to vector<8x8xf32>
    %234 = vector.extract_strided_slice %231 {offsets = [0, 16], sizes = [8, 8], strides = [1, 1]} : vector<8x32xf32> to vector<8x8xf32>
    %235 = vector.extract_strided_slice %231 {offsets = [0, 24], sizes = [8, 8], strides = [1, 1]} : vector<8x32xf32> to vector<8x8xf32>
    %236 = vector.extract_strided_slice %232 {offsets = [0, 0], sizes = [2, 8], strides = [1, 1]} : vector<8x8xf32> to vector<2x8xf32>
    %237 = vector.extract_strided_slice %233 {offsets = [0, 0], sizes = [2, 8], strides = [1, 1]} : vector<8x8xf32> to vector<2x8xf32>
    %238 = vector.extract_strided_slice %234 {offsets = [0, 0], sizes = [2, 8], strides = [1, 1]} : vector<8x8xf32> to vector<2x8xf32>
    %239 = vector.extract_strided_slice %235 {offsets = [0, 0], sizes = [2, 8], strides = [1, 1]} : vector<8x8xf32> to vector<2x8xf32>
    %240 = tpu.concatenate %236, %237, %238, %239 in 0 : vector<2x8xf32>, vector<2x8xf32>, vector<2x8xf32>, vector<2x8xf32> -> vector<8x8xf32>
    %241 = vector.extract_strided_slice %232 {offsets = [2, 0], sizes = [2, 8], strides = [1, 1]} : vector<8x8xf32> to vector<2x8xf32>
    %242 = vector.extract_strided_slice %233 {offsets = [2, 0], sizes = [2, 8], strides = [1, 1]} : vector<8x8xf32> to vector<2x8xf32>
    %243 = vector.extract_strided_slice %234 {offsets = [2, 0], sizes = [2, 8], strides = [1, 1]} : vector<8x8xf32> to vector<2x8xf32>
    %244 = vector.extract_strided_slice %235 {offsets = [2, 0], sizes = [2, 8], strides = [1, 1]} : vector<8x8xf32> to vector<2x8xf32>
    %245 = tpu.concatenate %241, %242, %243, %244 in 0 : vector<2x8xf32>, vector<2x8xf32>, vector<2x8xf32>, vector<2x8xf32> -> vector<8x8xf32>
    %246 = vector.extract_strided_slice %232 {offsets = [4, 0], sizes = [2, 8], strides = [1, 1]} : vector<8x8xf32> to vector<2x8xf32>
    %247 = vector.extract_strided_slice %233 {offsets = [4, 0], sizes = [2, 8], strides = [1, 1]} : vector<8x8xf32> to vector<2x8xf32>
    %248 = vector.extract_strided_slice %234 {offsets = [4, 0], sizes = [2, 8], strides = [1, 1]} : vector<8x8xf32> to vector<2x8xf32>
    %249 = vector.extract_strided_slice %235 {offsets = [4, 0], sizes = [2, 8], strides = [1, 1]} : vector<8x8xf32> to vector<2x8xf32>
    %250 = tpu.concatenate %246, %247, %248, %249 in 0 : vector<2x8xf32>, vector<2x8xf32>, vector<2x8xf32>, vector<2x8xf32> -> vector<8x8xf32>
    %251 = vector.extract_strided_slice %232 {offsets = [6, 0], sizes = [2, 8], strides = [1, 1]} : vector<8x8xf32> to vector<2x8xf32>
    %252 = vector.extract_strided_slice %233 {offsets = [6, 0], sizes = [2, 8], strides = [1, 1]} : vector<8x8xf32> to vector<2x8xf32>
    %253 = vector.extract_strided_slice %234 {offsets = [6, 0], sizes = [2, 8], strides = [1, 1]} : vector<8x8xf32> to vector<2x8xf32>
    %254 = vector.extract_strided_slice %235 {offsets = [6, 0], sizes = [2, 8], strides = [1, 1]} : vector<8x8xf32> to vector<2x8xf32>
    %255 = tpu.concatenate %251, %252, %253, %254 in 0 : vector<2x8xf32>, vector<2x8xf32>, vector<2x8xf32>, vector<2x8xf32> -> vector<8x8xf32>
    %256 = vector.shape_cast %240 : vector<8x8xf32> to vector<1x8x8xf32>
    %257 = vector.shape_cast %245 : vector<8x8xf32> to vector<1x8x8xf32>
    %258 = vector.shape_cast %250 : vector<8x8xf32> to vector<1x8x8xf32>
    %259 = vector.shape_cast %255 : vector<8x8xf32> to vector<1x8x8xf32>
    %260 = tpu.concatenate %256, %257, %258, %259 in 0 : vector<1x8x8xf32>, vector<1x8x8xf32>, vector<1x8x8xf32>, vector<1x8x8xf32> -> vector<4x8x8xf32>
    %261 = arith.truncf %260 : vector<4x8x8xf32> to vector<4x8x8xbf16>
    %262 = vector.extract_strided_slice %230 {offsets = [0, 32], sizes = [8, 32], strides = [1, 1]} : vector<8x96xf32> to vector<8x32xf32>
    %263 = vector.extract_strided_slice %262 {offsets = [0, 0], sizes = [8, 8], strides = [1, 1]} : vector<8x32xf32> to vector<8x8xf32>
    %264 = vector.extract_strided_slice %262 {offsets = [0, 8], sizes = [8, 8], strides = [1, 1]} : vector<8x32xf32> to vector<8x8xf32>
    %265 = vector.extract_strided_slice %262 {offsets = [0, 16], sizes = [8, 8], strides = [1, 1]} : vector<8x32xf32> to vector<8x8xf32>
    %266 = vector.extract_strided_slice %262 {offsets = [0, 24], sizes = [8, 8], strides = [1, 1]} : vector<8x32xf32> to vector<8x8xf32>
    %267 = vector.extract_strided_slice %263 {offsets = [0, 0], sizes = [2, 8], strides = [1, 1]} : vector<8x8xf32> to vector<2x8xf32>
    %268 = vector.extract_strided_slice %264 {offsets = [0, 0], sizes = [2, 8], strides = [1, 1]} : vector<8x8xf32> to vector<2x8xf32>
    %269 = vector.extract_strided_slice %265 {offsets = [0, 0], sizes = [2, 8], strides = [1, 1]} : vector<8x8xf32> to vector<2x8xf32>
    %270 = vector.extract_strided_slice %266 {offsets = [0, 0], sizes = [2, 8], strides = [1, 1]} : vector<8x8xf32> to vector<2x8xf32>
    %271 = tpu.concatenate %267, %268, %269, %270 in 0 : vector<2x8xf32>, vector<2x8xf32>, vector<2x8xf32>, vector<2x8xf32> -> vector<8x8xf32>
    %272 = vector.extract_strided_slice %263 {offsets = [2, 0], sizes = [2, 8], strides = [1, 1]} : vector<8x8xf32> to vector<2x8xf32>
    %273 = vector.extract_strided_slice %264 {offsets = [2, 0], sizes = [2, 8], strides = [1, 1]} : vector<8x8xf32> to vector<2x8xf32>
    %274 = vector.extract_strided_slice %265 {offsets = [2, 0], sizes = [2, 8], strides = [1, 1]} : vector<8x8xf32> to vector<2x8xf32>
    %275 = vector.extract_strided_slice %266 {offsets = [2, 0], sizes = [2, 8], strides = [1, 1]} : vector<8x8xf32> to vector<2x8xf32>
    %276 = tpu.concatenate %272, %273, %274, %275 in 0 : vector<2x8xf32>, vector<2x8xf32>, vector<2x8xf32>, vector<2x8xf32> -> vector<8x8xf32>
    %277 = vector.extract_strided_slice %263 {offsets = [4, 0], sizes = [2, 8], strides = [1, 1]} : vector<8x8xf32> to vector<2x8xf32>
    %278 = vector.extract_strided_slice %264 {offsets = [4, 0], sizes = [2, 8], strides = [1, 1]} : vector<8x8xf32> to vector<2x8xf32>
    %279 = vector.extract_strided_slice %265 {offsets = [4, 0], sizes = [2, 8], strides = [1, 1]} : vector<8x8xf32> to vector<2x8xf32>
    %280 = vector.extract_strided_slice %266 {offsets = [4, 0], sizes = [2, 8], strides = [1, 1]} : vector<8x8xf32> to vector<2x8xf32>
    %281 = tpu.concatenate %277, %278, %279, %280 in 0 : vector<2x8xf32>, vector<2x8xf32>, vector<2x8xf32>, vector<2x8xf32> -> vector<8x8xf32>
    %282 = vector.extract_strided_slice %263 {offsets = [6, 0], sizes = [2, 8], strides = [1, 1]} : vector<8x8xf32> to vector<2x8xf32>
    %283 = vector.extract_strided_slice %264 {offsets = [6, 0], sizes = [2, 8], strides = [1, 1]} : vector<8x8xf32> to vector<2x8xf32>
    %284 = vector.extract_strided_slice %265 {offsets = [6, 0], sizes = [2, 8], strides = [1, 1]} : vector<8x8xf32> to vector<2x8xf32>
    %285 = vector.extract_strided_slice %266 {offsets = [6, 0], sizes = [2, 8], strides = [1, 1]} : vector<8x8xf32> to vector<2x8xf32>
    %286 = tpu.concatenate %282, %283, %284, %285 in 0 : vector<2x8xf32>, vector<2x8xf32>, vector<2x8xf32>, vector<2x8xf32> -> vector<8x8xf32>
    %287 = vector.shape_cast %271 : vector<8x8xf32> to vector<1x8x8xf32>
    %288 = vector.shape_cast %276 : vector<8x8xf32> to vector<1x8x8xf32>
    %289 = vector.shape_cast %281 : vector<8x8xf32> to vector<1x8x8xf32>
    %290 = vector.shape_cast %286 : vector<8x8xf32> to vector<1x8x8xf32>
    %291 = tpu.concatenate %287, %288, %289, %290 in 0 : vector<1x8x8xf32>, vector<1x8x8xf32>, vector<1x8x8xf32>, vector<1x8x8xf32> -> vector<4x8x8xf32>
    %292 = arith.truncf %291 : vector<4x8x8xf32> to vector<4x8x8xbf16>
    %293 = vector.extract_strided_slice %230 {offsets = [0, 64], sizes = [8, 32], strides = [1, 1]} : vector<8x96xf32> to vector<8x32xf32>
    %294 = vector.extract_strided_slice %293 {offsets = [0, 0], sizes = [8, 8], strides = [1, 1]} : vector<8x32xf32> to vector<8x8xf32>
    %295 = vector.extract_strided_slice %293 {offsets = [0, 8], sizes = [8, 8], strides = [1, 1]} : vector<8x32xf32> to vector<8x8xf32>
    %296 = vector.extract_strided_slice %293 {offsets = [0, 16], sizes = [8, 8], strides = [1, 1]} : vector<8x32xf32> to vector<8x8xf32>
    %297 = vector.extract_strided_slice %293 {offsets = [0, 24], sizes = [8, 8], strides = [1, 1]} : vector<8x32xf32> to vector<8x8xf32>
    %298 = vector.extract_strided_slice %294 {offsets = [0, 0], sizes = [2, 8], strides = [1, 1]} : vector<8x8xf32> to vector<2x8xf32>
    %299 = vector.extract_strided_slice %295 {offsets = [0, 0], sizes = [2, 8], strides = [1, 1]} : vector<8x8xf32> to vector<2x8xf32>
    %300 = vector.extract_strided_slice %296 {offsets = [0, 0], sizes = [2, 8], strides = [1, 1]} : vector<8x8xf32> to vector<2x8xf32>
    %301 = vector.extract_strided_slice %297 {offsets = [0, 0], sizes = [2, 8], strides = [1, 1]} : vector<8x8xf32> to vector<2x8xf32>
    %302 = tpu.concatenate %298, %299, %300, %301 in 0 : vector<2x8xf32>, vector<2x8xf32>, vector<2x8xf32>, vector<2x8xf32> -> vector<8x8xf32>
    %303 = vector.extract_strided_slice %294 {offsets = [2, 0], sizes = [2, 8], strides = [1, 1]} : vector<8x8xf32> to vector<2x8xf32>
    %304 = vector.extract_strided_slice %295 {offsets = [2, 0], sizes = [2, 8], strides = [1, 1]} : vector<8x8xf32> to vector<2x8xf32>
    %305 = vector.extract_strided_slice %296 {offsets = [2, 0], sizes = [2, 8], strides = [1, 1]} : vector<8x8xf32> to vector<2x8xf32>
    %306 = vector.extract_strided_slice %297 {offsets = [2, 0], sizes = [2, 8], strides = [1, 1]} : vector<8x8xf32> to vector<2x8xf32>
    %307 = tpu.concatenate %303, %304, %305, %306 in 0 : vector<2x8xf32>, vector<2x8xf32>, vector<2x8xf32>, vector<2x8xf32> -> vector<8x8xf32>
    %308 = vector.extract_strided_slice %294 {offsets = [4, 0], sizes = [2, 8], strides = [1, 1]} : vector<8x8xf32> to vector<2x8xf32>
    %309 = vector.extract_strided_slice %295 {offsets = [4, 0], sizes = [2, 8], strides = [1, 1]} : vector<8x8xf32> to vector<2x8xf32>
    %310 = vector.extract_strided_slice %296 {offsets = [4, 0], sizes = [2, 8], strides = [1, 1]} : vector<8x8xf32> to vector<2x8xf32>
    %311 = vector.extract_strided_slice %297 {offsets = [4, 0], sizes = [2, 8], strides = [1, 1]} : vector<8x8xf32> to vector<2x8xf32>
    %312 = tpu.concatenate %308, %309, %310, %311 in 0 : vector<2x8xf32>, vector<2x8xf32>, vector<2x8xf32>, vector<2x8xf32> -> vector<8x8xf32>
    %313 = vector.extract_strided_slice %294 {offsets = [6, 0], sizes = [2, 8], strides = [1, 1]} : vector<8x8xf32> to vector<2x8xf32>
    %314 = vector.extract_strided_slice %295 {offsets = [6, 0], sizes = [2, 8], strides = [1, 1]} : vector<8x8xf32> to vector<2x8xf32>
    %315 = vector.extract_strided_slice %296 {offsets = [6, 0], sizes = [2, 8], strides = [1, 1]} : vector<8x8xf32> to vector<2x8xf32>
    %316 = vector.extract_strided_slice %297 {offsets = [6, 0], sizes = [2, 8], strides = [1, 1]} : vector<8x8xf32> to vector<2x8xf32>
    %317 = tpu.concatenate %313, %314, %315, %316 in 0 : vector<2x8xf32>, vector<2x8xf32>, vector<2x8xf32>, vector<2x8xf32> -> vector<8x8xf32>
    %318 = vector.shape_cast %302 : vector<8x8xf32> to vector<1x8x8xf32>
    %319 = vector.shape_cast %307 : vector<8x8xf32> to vector<1x8x8xf32>
    %320 = vector.shape_cast %312 : vector<8x8xf32> to vector<1x8x8xf32>
    %321 = vector.shape_cast %317 : vector<8x8xf32> to vector<1x8x8xf32>
    %322 = tpu.concatenate %318, %319, %320, %321 in 0 : vector<1x8x8xf32>, vector<1x8x8xf32>, vector<1x8x8xf32>, vector<1x8x8xf32> -> vector<4x8x8xf32>
    %323 = arith.truncf %322 : vector<4x8x8xf32> to vector<4x8x8xbf16>
    "tpu.trace_start"() <{level = 10 : i32, message = "hqe,hke->hqk"}> : () -> ()
    %cst_51 = arith.constant dense<0.000000e+00> : vector<4x8x8xf32>
    %324 = tpu.matmul %261, %292, %cst_51 {dimension_numbers = #tpu.dot_dimension_numbers<[2], [2], [1], [1], [0, 0, 0, 1, 1, 1], [0], [0]>} : vector<4x8x8xbf16>, vector<4x8x8xbf16>, vector<4x8x8xf32> -> vector<4x8x8xf32>
    "tpu.trace_stop"() : () -> ()
    %cst_52 = arith.constant 0.353553385 : f32
    %325 = vector.broadcast %cst_52 : f32 to vector<4x8x8xf32>
    %326 = arith.mulf %324, %325 : vector<4x8x8xf32>
    %cst_53 = arith.constant dense<0xFF800000> : vector<4x8xf32>
    %327 = vector.multi_reduction <maximumf>, %326, %cst_53 [2] : vector<4x8x8xf32> to vector<4x8xf32>
    %328 = vector.shape_cast %327 : vector<4x8xf32> to vector<4x8x1xf32>
    %329 = vector.broadcast %328 : vector<4x8x1xf32> to vector<4x8x8xf32>
    %330 = arith.subf %326, %329 : vector<4x8x8xf32>
    %331 = math.exp %330 : vector<4x8x8xf32>
    %cst_54 = arith.constant dense<0.000000e+00> : vector<4x8xf32>
    %332 = vector.multi_reduction <add>, %331, %cst_54 [2] : vector<4x8x8xf32> to vector<4x8xf32>
    %333 = vector.shape_cast %332 : vector<4x8xf32> to vector<4x8x1xf32>
    %334 = vector.broadcast %333 : vector<4x8x1xf32> to vector<4x8x8xf32>
    %335 = arith.divf %331, %334 : vector<4x8x8xf32>
    %336 = arith.truncf %335 : vector<4x8x8xf32> to vector<4x8x8xbf16>
    "tpu.trace_start"() <{level = 10 : i32, message = "hqk,hke->hqe"}> : () -> ()
    %cst_55 = arith.constant dense<0.000000e+00> : vector<4x8x8xf32>
    %337 = tpu.matmul %336, %323, %cst_55 {dimension_numbers = #tpu.dot_dimension_numbers<[2], [1], [1], [2], [0, 0, 0, 1, 1, 2], [0], [0]>} : vector<4x8x8xbf16>, vector<4x8x8xbf16>, vector<4x8x8xf32> -> vector<4x8x8xf32>
    "tpu.trace_stop"() : () -> ()
    %338 = vector.extract_strided_slice %337 {offsets = [0, 0, 0], sizes = [1, 2, 8], strides = [1, 1, 1]} : vector<4x8x8xf32> to vector<1x2x8xf32>
    %339 = vector.shape_cast %338 : vector<1x2x8xf32> to vector<2x8xf32>
    %340 = vector.extract_strided_slice %337 {offsets = [0, 2, 0], sizes = [1, 2, 8], strides = [1, 1, 1]} : vector<4x8x8xf32> to vector<1x2x8xf32>
    %341 = vector.shape_cast %340 : vector<1x2x8xf32> to vector<2x8xf32>
    %342 = vector.extract_strided_slice %337 {offsets = [0, 4, 0], sizes = [1, 2, 8], strides = [1, 1, 1]} : vector<4x8x8xf32> to vector<1x2x8xf32>
    %343 = vector.shape_cast %342 : vector<1x2x8xf32> to vector<2x8xf32>
    %344 = vector.extract_strided_slice %337 {offsets = [0, 6, 0], sizes = [1, 2, 8], strides = [1, 1, 1]} : vector<4x8x8xf32> to vector<1x2x8xf32>
    %345 = vector.shape_cast %344 : vector<1x2x8xf32> to vector<2x8xf32>
    %346 = tpu.concatenate %339, %341, %343, %345 in 1 : vector<2x8xf32>, vector<2x8xf32>, vector<2x8xf32>, vector<2x8xf32> -> vector<2x32xf32>
    %347 = vector.extract_strided_slice %337 {offsets = [1, 0, 0], sizes = [1, 2, 8], strides = [1, 1, 1]} : vector<4x8x8xf32> to vector<1x2x8xf32>
    %348 = vector.shape_cast %347 : vector<1x2x8xf32> to vector<2x8xf32>
    %349 = vector.extract_strided_slice %337 {offsets = [1, 2, 0], sizes = [1, 2, 8], strides = [1, 1, 1]} : vector<4x8x8xf32> to vector<1x2x8xf32>
    %350 = vector.shape_cast %349 : vector<1x2x8xf32> to vector<2x8xf32>
    %351 = vector.extract_strided_slice %337 {offsets = [1, 4, 0], sizes = [1, 2, 8], strides = [1, 1, 1]} : vector<4x8x8xf32> to vector<1x2x8xf32>
    %352 = vector.shape_cast %351 : vector<1x2x8xf32> to vector<2x8xf32>
    %353 = vector.extract_strided_slice %337 {offsets = [1, 6, 0], sizes = [1, 2, 8], strides = [1, 1, 1]} : vector<4x8x8xf32> to vector<1x2x8xf32>
    %354 = vector.shape_cast %353 : vector<1x2x8xf32> to vector<2x8xf32>
    %355 = tpu.concatenate %348, %350, %352, %354 in 1 : vector<2x8xf32>, vector<2x8xf32>, vector<2x8xf32>, vector<2x8xf32> -> vector<2x32xf32>
    %356 = vector.extract_strided_slice %337 {offsets = [2, 0, 0], sizes = [1, 2, 8], strides = [1, 1, 1]} : vector<4x8x8xf32> to vector<1x2x8xf32>
    %357 = vector.shape_cast %356 : vector<1x2x8xf32> to vector<2x8xf32>
    %358 = vector.extract_strided_slice %337 {offsets = [2, 2, 0], sizes = [1, 2, 8], strides = [1, 1, 1]} : vector<4x8x8xf32> to vector<1x2x8xf32>
    %359 = vector.shape_cast %358 : vector<1x2x8xf32> to vector<2x8xf32>
    %360 = vector.extract_strided_slice %337 {offsets = [2, 4, 0], sizes = [1, 2, 8], strides = [1, 1, 1]} : vector<4x8x8xf32> to vector<1x2x8xf32>
    %361 = vector.shape_cast %360 : vector<1x2x8xf32> to vector<2x8xf32>
    %362 = vector.extract_strided_slice %337 {offsets = [2, 6, 0], sizes = [1, 2, 8], strides = [1, 1, 1]} : vector<4x8x8xf32> to vector<1x2x8xf32>
    %363 = vector.shape_cast %362 : vector<1x2x8xf32> to vector<2x8xf32>
    %364 = tpu.concatenate %357, %359, %361, %363 in 1 : vector<2x8xf32>, vector<2x8xf32>, vector<2x8xf32>, vector<2x8xf32> -> vector<2x32xf32>
    %365 = vector.extract_strided_slice %337 {offsets = [3, 0, 0], sizes = [1, 2, 8], strides = [1, 1, 1]} : vector<4x8x8xf32> to vector<1x2x8xf32>
    %366 = vector.shape_cast %365 : vector<1x2x8xf32> to vector<2x8xf32>
    %367 = vector.extract_strided_slice %337 {offsets = [3, 2, 0], sizes = [1, 2, 8], strides = [1, 1, 1]} : vector<4x8x8xf32> to vector<1x2x8xf32>
    %368 = vector.shape_cast %367 : vector<1x2x8xf32> to vector<2x8xf32>
    %369 = vector.extract_strided_slice %337 {offsets = [3, 4, 0], sizes = [1, 2, 8], strides = [1, 1, 1]} : vector<4x8x8xf32> to vector<1x2x8xf32>
    %370 = vector.shape_cast %369 : vector<1x2x8xf32> to vector<2x8xf32>
    %371 = vector.extract_strided_slice %337 {offsets = [3, 6, 0], sizes = [1, 2, 8], strides = [1, 1, 1]} : vector<4x8x8xf32> to vector<1x2x8xf32>
    %372 = vector.shape_cast %371 : vector<1x2x8xf32> to vector<2x8xf32>
    %373 = tpu.concatenate %366, %368, %370, %372 in 1 : vector<2x8xf32>, vector<2x8xf32>, vector<2x8xf32>, vector<2x8xf32> -> vector<2x32xf32>
    %374 = tpu.concatenate %346, %355, %364, %373 in 0 : vector<2x32xf32>, vector<2x32xf32>, vector<2x32xf32>, vector<2x32xf32> -> vector<8x32xf32>
    %375 = vector.broadcast %3 : vector<1x32xf32> to vector<8x32xf32>
    %376 = arith.addf %226, %375 : vector<8x32xf32>
    %377 = arith.truncf %374 : vector<8x32xf32> to vector<8x32xbf16>
    %cst_56 = arith.constant dense<0.000000e+00> : vector<8x32xf32>
    %378 = tpu.matmul %377, %2, %cst_56 {dimension_numbers = #tpu.dot_dimension_numbers<[1], [0], [0], [1], [0, 0, 1, 1], [], []>} : vector<8x32xbf16>, vector<32x32xbf16>, vector<8x32xf32> -> vector<8x32xf32>
    %379 = arith.addf %376, %378 : vector<8x32xf32>
    %cst_57 = arith.constant dense<0.000000e+00> : vector<8xf32>
    %380 = vector.multi_reduction <add>, %379, %cst_57 [1] : vector<8x32xf32> to vector<8xf32>
    %381 = vector.shape_cast %380 : vector<8xf32> to vector<8x1xf32>
    %cst_58 = arith.constant 3.200000e+01 : f32
    %382 = vector.broadcast %cst_58 : f32 to vector<8x1xf32>
    %383 = arith.divf %381, %382 : vector<8x1xf32>
    %384 = vector.broadcast %383 : vector<8x1xf32> to vector<8x32xf32>
    %385 = arith.subf %379, %384 : vector<8x32xf32>
    %386 = arith.mulf %385, %385 : vector<8x32xf32>
    %cst_59 = arith.constant dense<0.000000e+00> : vector<8xf32>
    %387 = vector.multi_reduction <add>, %386, %cst_59 [1] : vector<8x32xf32> to vector<8xf32>
    %388 = vector.shape_cast %387 : vector<8xf32> to vector<8x1xf32>
    %cst_60 = arith.constant 3.200000e+01 : f32
    %389 = vector.broadcast %cst_60 : f32 to vector<8x1xf32>
    %390 = arith.divf %388, %389 : vector<8x1xf32>
    %391 = vector.broadcast %383 : vector<8x1xf32> to vector<8x32xf32>
    %392 = arith.subf %379, %391 : vector<8x32xf32>
    %cst_61 = arith.constant 9.99999974E-6 : f32
    %393 = vector.broadcast %cst_61 : f32 to vector<8x1xf32>
    %394 = arith.addf %390, %393 : vector<8x1xf32>
    %395 = math.rsqrt %394 : vector<8x1xf32>
    %396 = vector.broadcast %395 : vector<8x1xf32> to vector<8x32xf32>
    %397 = arith.mulf %392, %396 : vector<8x32xf32>
    %398 = vector.broadcast %4 : vector<1x32xf32> to vector<8x32xf32>
    %399 = arith.mulf %397, %398 : vector<8x32xf32>
    %400 = vector.broadcast %5 : vector<1x32xf32> to vector<8x32xf32>
    %401 = arith.addf %399, %400 : vector<8x32xf32>
    %402 = arith.truncf %401 : vector<8x32xf32> to vector<8x32xbf16>
    %cst_62 = arith.constant dense<0.000000e+00> : vector<8x64xf32>
    %403 = tpu.matmul %402, %6, %cst_62 {dimension_numbers = #tpu.dot_dimension_numbers<[1], [0], [0], [1], [0, 0, 1, 1], [], []>} : vector<8x32xbf16>, vector<32x64xbf16>, vector<8x64xf32> -> vector<8x64xf32>
    %404 = vector.broadcast %7 : vector<1x64xf32> to vector<8x64xf32>
    %405 = arith.addf %403, %404 : vector<8x64xf32>
    %cst_63 = arith.constant 0.000000e+00 : f32
    %406 = vector.broadcast %cst_63 : f32 to vector<8x64xf32>
    %407 = arith.maximumf %405, %406 : vector<8x64xf32>
    %408 = arith.truncf %407 : vector<8x64xf32> to vector<8x64xbf16>
    %cst_64 = arith.constant dense<0.000000e+00> : vector<8x32xf32>
    %409 = tpu.matmul %408, %8, %cst_64 {dimension_numbers = #tpu.dot_dimension_numbers<[1], [0], [0], [1], [0, 0, 1, 1], [], []>} : vector<8x64xbf16>, vector<64x32xbf16>, vector<8x32xf32> -> vector<8x32xf32>
    %410 = vector.broadcast %9 : vector<1x32xf32> to vector<8x32xf32>
    %411 = arith.addf %409, %410 : vector<8x32xf32>
    %412 = arith.addf %411, %401 : vector<8x32xf32>
    %cst_65 = arith.constant dense<0.000000e+00> : vector<8xf32>
    %413 = vector.multi_reduction <add>, %412, %cst_65 [1] : vector<8x32xf32> to vector<8xf32>
    %414 = vector.shape_cast %413 : vector<8xf32> to vector<8x1xf32>
    %cst_66 = arith.constant 3.200000e+01 : f32
    %415 = vector.broadcast %cst_66 : f32 to vector<8x1xf32>
    %416 = arith.divf %414, %415 : vector<8x1xf32>
    %417 = vector.broadcast %416 : vector<8x1xf32> to vector<8x32xf32>
    %418 = arith.subf %412, %417 : vector<8x32xf32>
    %419 = arith.mulf %418, %418 : vector<8x32xf32>
    %cst_67 = arith.constant dense<0.000000e+00> : vector<8xf32>
    %420 = vector.multi_reduction <add>, %419, %cst_67 [1] : vector<8x32xf32> to vector<8xf32>
    %421 = vector.shape_cast %420 : vector<8xf32> to vector<8x1xf32>
    %cst_68 = arith.constant 3.200000e+01 : f32
    %422 = vector.broadcast %cst_68 : f32 to vector<8x1xf32>
    %423 = arith.divf %421, %422 : vector<8x1xf32>
    %424 = vector.broadcast %416 : vector<8x1xf32> to vector<8x32xf32>
    %425 = arith.subf %412, %424 : vector<8x32xf32>
    %cst_69 = arith.constant 9.99999974E-6 : f32
    %426 = vector.broadcast %cst_69 : f32 to vector<8x1xf32>
    %427 = arith.addf %423, %426 : vector<8x1xf32>
    %428 = math.rsqrt %427 : vector<8x1xf32>
    %429 = vector.broadcast %428 : vector<8x1xf32> to vector<8x32xf32>
    %430 = arith.mulf %425, %429 : vector<8x32xf32>
    %431 = vector.broadcast %10 : vector<1x32xf32> to vector<8x32xf32>
    %432 = arith.mulf %430, %431 : vector<8x32xf32>
    %433 = vector.broadcast %11 : vector<1x32xf32> to vector<8x32xf32>
    %434 = arith.addf %432, %433 : vector<8x32xf32>
    %c1_70 = arith.constant 1 : index
    %c0_71 = arith.constant 0 : index
    %c0_72 = arith.constant 0 : index
    %435 = vector.load %arg14[%c1_70, %c0_71, %c0_72] : memref<2x8x32xf32, #tpu.memory_space<vmem>>, vector<1x8x32xf32>
    %436 = vector.shape_cast %435 : vector<1x8x32xf32> to vector<8x32xf32>
    %437 = vector.shape_cast %434 : vector<8x32xf32> to vector<1x8x32xf32>
    tpu.vector_store %arg14[%c1_70, %c0_71, %c0_72], %437 {strides = array<i32>} : memref<2x8x32xf32, #tpu.memory_space<vmem>>, vector<1x8x32xf32>,
    return
  }
  func.func @transform_0(%arg0: i32) -> (i32, i32, i32) {
    %c0_i32 = arith.constant 0 : i32
    %c0_i32_0 = arith.constant 0 : i32
    %c0_i32_1 = arith.constant 0 : i32
    return %arg0, %c0_i32, %c0_i32_0 : i32, i32, i32
  }
  func.func @transform_1(%arg0: i32) -> (i32, i32) {
    %c0_i32 = arith.constant 0 : i32
    %c0_i32_0 = arith.constant 0 : i32
    %c0_i32_1 = arith.constant 0 : i32
    return %c0_i32, %c0_i32_0 : i32, i32
  }
  func.func @transform_2(%arg0: i32) -> (i32, i32) {
    %c0_i32 = arith.constant 0 : i32
    %c0_i32_0 = arith.constant 0 : i32
    %c0_i32_1 = arith.constant 0 : i32
    return %c0_i32, %c0_i32_0 : i32, i32
  }
  func.func @transform_3(%arg0: i32) -> (i32, i32) {
    %c0_i32 = arith.constant 0 : i32
    %c0_i32_0 = arith.constant 0 : i32
    %c0_i32_1 = arith.constant 0 : i32
    return %c0_i32, %c0_i32_0 : i32, i32
  }
  func.func @transform_4(%arg0: i32) -> (i32, i32) {
    %c0_i32 = arith.constant 0 : i32
    %c0_i32_0 = arith.constant 0 : i32
    %c0_i32_1 = arith.constant 0 : i32
    return %c0_i32, %c0_i32_0 : i32, i32
  }
  func.func @transform_5(%arg0: i32) -> (i32, i32) {
    %c0_i32 = arith.constant 0 : i32
    %c0_i32_0 = arith.constant 0 : i32
    %c0_i32_1 = arith.constant 0 : i32
    return %c0_i32, %c0_i32_0 : i32, i32
  }
  func.func @transform_6(%arg0: i32) -> (i32, i32) {
    %c0_i32 = arith.constant 0 : i32
    %c0_i32_0 = arith.constant 0 : i32
    %c0_i32_1 = arith.constant 0 : i32
    return %c0_i32, %c0_i32_0 : i32, i32
  }
  func.func @transform_7(%arg0: i32) -> (i32, i32) {
    %c0_i32 = arith.constant 0 : i32
    %c0_i32_0 = arith.constant 0 : i32
    %c0_i32_1 = arith.constant 0 : i32
    return %c0_i32, %c0_i32_0 : i32, i32
  }
  func.func @transform_8(%arg0: i32) -> (i32, i32) {
    %c0_i32 = arith.constant 0 : i32
    %c0_i32_0 = arith.constant 0 : i32
    %c0_i32_1 = arith.constant 0 : i32
    return %c0_i32, %c0_i32_0 : i32, i32
  }
  func.func @transform_9(%arg0: i32) -> (i32, i32) {
    %c0_i32 = arith.constant 0 : i32
    %c0_i32_0 = arith.constant 0 : i32
    %c0_i32_1 = arith.constant 0 : i32
    return %c0_i32, %c0_i32_0 : i32, i32
  }
  func.func @transform_10(%arg0: i32) -> (i32, i32) {
    %c0_i32 = arith.constant 0 : i32
    %c0_i32_0 = arith.constant 0 : i32
    %c0_i32_1 = arith.constant 0 : i32
    return %c0_i32, %c0_i32_0 : i32, i32
  }
  func.func @transform_11(%arg0: i32) -> (i32, i32) {
    %c0_i32 = arith.constant 0 : i32
    %c0_i32_0 = arith.constant 0 : i32
    %c0_i32_1 = arith.constant 0 : i32
    return %c0_i32, %c0_i32_0 : i32, i32
  }
  func.func @transform_12(%arg0: i32) -> (i32, i32) {
    %c0_i32 = arith.constant 0 : i32
    %c0_i32_0 = arith.constant 0 : i32
    %c0_i32_1 = arith.constant 0 : i32
    return %c0_i32, %c0_i32_0 : i32, i32
  }
  func.func @transform_13(%arg0: i32) -> (i32, i32, i32) {
    %c0_i32 = arith.constant 0 : i32
    %c0_i32_0 = arith.constant 0 : i32
    %c0_i32_1 = arith.constant 0 : i32
    return %arg0, %c0_i32, %c0_i32_0 : i32, i32, i32
  }
}

</mosaic_0001>

<llo_original>
// kernel: tpu_custom_call.1
$region0: #{tpu_custom_call.1}
  #allocation0 [shape = 'u32[]', space=smem, size = 0x4, offset = 0x4, fixed_abs, tag = 'smem constant byte address 0x4 - core index']
  #allocation1 [shape = 'u32[144,128]{1,0:T(1,128)}', space=vmem, size = 0x12000, scoped, tag = 'internal scratch']
  %s0 = inlined_call_operand.vmem [shape: f32[2,8,32], index: 0, kind: input, shape index: {}]
  %s1 = inlined_call_operand.vmem [shape: bf16[32,96], index: 1, kind: input, shape index: {}]
  %s2 = inlined_call_operand.vmem [shape: f32[1,96], index: 2, kind: input, shape index: {}]
  %s3 = inlined_call_operand.vmem [shape: bf16[32,32], index: 3, kind: input, shape index: {}]
  %s4 = inlined_call_operand.vmem [shape: f32[1,32], index: 4, kind: input, shape index: {}]
  %s5 = inlined_call_operand.vmem [shape: f32[1,32], index: 5, kind: input, shape index: {}]
  %s6 = inlined_call_operand.vmem [shape: f32[1,32], index: 6, kind: input, shape index: {}]
  %s7 = inlined_call_operand.hbm [shape: bf16[32,64], index: 7, kind: input, shape index: {}]
  %s8 = inlined_call_operand.vmem [shape: f32[1,64], index: 8, kind: input, shape index: {}]
  %s9 = inlined_call_operand.vmem [shape: bf16[64,32], index: 9, kind: input, shape index: {}]
  %s10 = inlined_call_operand.vmem [shape: f32[1,32], index: 10, kind: input, shape index: {}]
  %s11 = inlined_call_operand.vmem [shape: f32[1,32], index: 11, kind: input, shape index: {}]
  %s12 = inlined_call_operand.vmem [shape: f32[1,32], index: 12, kind: input, shape index: {}]
  %s13 = inlined_call_operand.hbm [shape: f32[2,8,32], index: 13, kind: output, shape index: {}]
  %s14 = sld [smem:[#allocation0]]
  $region66: #{tpu_custom_call.1} parent=0
    _
  %s16 = ssub.s32 1, %s14
  %s17 = scalar_select 0, %s16, %s14
  $region1: #{tpu_custom_call.1} parent=0
    #allocation2 [shape = 'u8[8192]{0}', space=vmem, size = 0x2000, scoped, tag = 'input window, operand 7, single buffered']
    #allocation3 [shape = 's32[1]{0}', space=sflag, size = 0x4, scoped, tag = 'scoped memory for tpu_custom_call.1']
    #allocation4 [shape = 's32[1]{0}', space=sflag, size = 0x4, scoped, tag = 'scoped memory for tpu_custom_call.1']
    #allocation5 [shape = 'u8[8192]{0}', space=vmem, size = 0x2000, scoped, tag = 'output window, operand 0, single buffered']
    %18 = vsyncpa [#allocation3], 0
    %19 = vsyncpa [#allocation4], 0
    // Predicated region
    $region2: #{tpu_custom_call.1} parent=1 // pred_check
      _
    $region3: #{tpu_custom_call.1} parent=1 // pred_check_branch
      %21 = sbr.rel (0) target = $region5
    $region4: #{tpu_custom_call.1} parent=1 // pred_region
      _
    $region5: #{tpu_custom_call.1} parent=1 // pred_fallthru
      _
    // Predicated region
    $region6: #{tpu_custom_call.1} parent=1 // pred_check
      _
    $region7: #{tpu_custom_call.1} parent=1 // pred_check_branch
      %23 = sbr.rel (0) target = $region9
    $region8: #{tpu_custom_call.1} parent=1 // pred_region
      _
    $region9: #{tpu_custom_call.1} parent=1 // pred_fallthru
      _
    // Predicated region
    $region10: #{tpu_custom_call.1} parent=1 // pred_check
      _
    $region11: #{tpu_custom_call.1} parent=1 // pred_check_branch
      %25 = sbr.rel (0) target = $region13
    $region12: #{tpu_custom_call.1} parent=1 // pred_region
      _
    $region13: #{tpu_custom_call.1} parent=1 // pred_fallthru
      _
    // Predicated region
    $region14: #{tpu_custom_call.1} parent=1 // pred_check
      _
    $region15: #{tpu_custom_call.1} parent=1 // pred_check_branch
      %27 = sbr.rel (0) target = $region17
    $region16: #{tpu_custom_call.1} parent=1 // pred_region
      _
    $region17: #{tpu_custom_call.1} parent=1 // pred_fallthru
      _
    // Predicated region
    $region18: #{tpu_custom_call.1} parent=1 // pred_check
      _
    $region19: #{tpu_custom_call.1} parent=1 // pred_check_branch
      %29 = sbr.rel (0) target = $region21
    $region20: #{tpu_custom_call.1} parent=1 // pred_region
      _
    $region21: #{tpu_custom_call.1} parent=1 // pred_fallthru
      _
    // Predicated region
    $region22: #{tpu_custom_call.1} parent=1 // pred_check
      _
    $region23: #{tpu_custom_call.1} parent=1 // pred_check_branch
      %31 = sbr.rel (0) target = $region25
    $region24: #{tpu_custom_call.1} parent=1 // pred_region
      _
    $region25: #{tpu_custom_call.1} parent=1 // pred_fallthru
      _
    // Predicated region
    $region26: #{tpu_custom_call.1} parent=1 // pred_check
      _
    $region27: #{tpu_custom_call.1} parent=1 // pred_check_branch
      %33 = sbr.rel (0) target = $region29
    $region28: #{tpu_custom_call.1} parent=1 // pred_region
      _
    $region29: #{tpu_custom_call.1} parent=1 // pred_fallthru
      _
    // Predicated region
    $region30: #{tpu_custom_call.1} parent=1 // pred_check
      _
    $region31: #{tpu_custom_call.1} parent=1 // pred_check_branch
      %35 = sbr.rel (0) target = $region33
    $region32: #{tpu_custom_call.1} parent=1 // pred_region
      %s37 = ssub.s32 256, 256
      %38 = vsyncadd [#allocation3], %s37
      %s39 = sshll.u32 [#allocation2], 4
      %s40 = int_to_ptr.vmem [resolvable:$true] %s39
      %45 = dma.hbm_to_vmem [thread:$0]  %s7, 256, %s40, [#allocation3], 64, 64, 4
    $region33: #{tpu_custom_call.1} parent=1 // pred_fallthru
      _
    // Predicated region
    $region34: #{tpu_custom_call.1} parent=1 // pred_check
      _
    $region35: #{tpu_custom_call.1} parent=1 // pred_check_branch
      %47 = sbr.rel (0) target = $region37
    $region36: #{tpu_custom_call.1} parent=1 // pred_region
      _
    $region37: #{tpu_custom_call.1} parent=1 // pred_fallthru
      _
    // Predicated region
    $region38: #{tpu_custom_call.1} parent=1 // pred_check
      _
    $region39: #{tpu_custom_call.1} parent=1 // pred_check_branch
      %49 = sbr.rel (0) target = $region41
    $region40: #{tpu_custom_call.1} parent=1 // pred_region
      _
    $region41: #{tpu_custom_call.1} parent=1 // pred_fallthru
      _
    // Predicated region
    $region42: #{tpu_custom_call.1} parent=1 // pred_check
      _
    $region43: #{tpu_custom_call.1} parent=1 // pred_check_branch
      %51 = sbr.rel (0) target = $region45
    $region44: #{tpu_custom_call.1} parent=1 // pred_region
      _
    $region45: #{tpu_custom_call.1} parent=1 // pred_fallthru
      _
    // Predicated region
    $region46: #{tpu_custom_call.1} parent=1 // pred_check
      _
    $region47: #{tpu_custom_call.1} parent=1 // pred_check_branch
      %53 = sbr.rel (0) target = $region49
    $region48: #{tpu_custom_call.1} parent=1 // pred_region
      _
    $region49: #{tpu_custom_call.1} parent=1 // pred_fallthru
      _
    // Predicated region
    $region50: #{tpu_custom_call.1} parent=1 // pred_check
      _
    $region51: #{tpu_custom_call.1} parent=1 // pred_check_branch
      %55 = sbr.rel (0) target = $region53
    $region52: #{tpu_custom_call.1} parent=1 // pred_region
      _
    $region53: #{tpu_custom_call.1} parent=1 // pred_fallthru
      _
    // Predicated region
    $region54: #{tpu_custom_call.1} parent=1 // pred_check
      _
    $region55: #{tpu_custom_call.1} parent=1 // pred_check_branch
      %57 = sbr.rel (0) target = $region57
    $region56: #{tpu_custom_call.1} parent=1 // pred_region
      %58 = dma.done [#allocation3], 256
    $region57: #{tpu_custom_call.1} parent=1 // pred_fallthru
      _
    %v60 = vld [vmem:[%s1] sm:$0xf]
    %v61 = vld [vmem:[%s1 + $0x4] sm:$0xf]
    %v62 = vld [vmem:[%s1 + $0x8] sm:$0xf]
    %v63 = vld [vmem:[%s1 + $0xc] sm:$0xf]
    %v64 = vld [vmem:[%s2] sm:$0x1]
    %v65 = vld [vmem:[%s3] sm:$0xf]
    %v66 = vld [vmem:[%s3 + $0x4] sm:$0xf]
    %v67 = vld [vmem:[%s3 + $0x8] sm:$0xf]
    %v68 = vld [vmem:[%s3 + $0xc] sm:$0xf]
    %v69 = vld [vmem:[%s4] sm:$0x1]
    %v70 = vld [vmem:[%s5] sm:$0x1]
    %v71 = vld [vmem:[%s6] sm:$0x1]
    %v72 = vld [vmem:[#allocation2] sm:$0xf]
    %v73 = vld [vmem:[#allocation2 + $0x4] sm:$0xf]
    %v74 = vld [vmem:[#allocation2 + $0x8] sm:$0xf]
    %v75 = vld [vmem:[#allocation2 + $0xc] sm:$0xf]
    %v76 = vld [vmem:[%s8] sm:$0x1]
    %v77 = vld [vmem:[%s9] sm:$0xf]
    %v78 = vld [vmem:[%s9 + $0x4] sm:$0xf]
    %v79 = vld [vmem:[%s9 + $0x8] sm:$0xf]
    %v80 = vld [vmem:[%s9 + $0xc] sm:$0xf]
    %v81 = vld [vmem:[%s9 + $0x10] sm:$0xf]
    %v82 = vld [vmem:[%s9 + $0x14] sm:$0xf]
    %v83 = vld [vmem:[%s9 + $0x18] sm:$0xf]
    %v84 = vld [vmem:[%s9 + $0x1c] sm:$0xf]
    %v85 = vld [vmem:[%s10] sm:$0x1]
    %v86 = vld [vmem:[%s11] sm:$0x1]
    %v87 = vld [vmem:[%s12] sm:$0x1]
    %v88 = vld [vmem:[%s0] sm:$0xff]
    %v89 = vpack.c.bf16 %v88, %v88
    %v91 = vlaneseq
    %v92 = vshrl.u32 %v91, 7
    %v93 = vsub.s32 0, %v92
    %v94 = vrot.slane %v64, %v93
    %v100 = vunpack.c.l.b16 %v60
    %v101 = vunpack.c.l.b16 %v61
    %v102 = vunpack.c.l.b16 %v62
    %v103 = vunpack.c.l.b16 %v63
    %v104 = vpack.c.b16 %v101, %v100
    %v105 = vpack.c.b16 %v103, %v102
    %vm108 = vcmask 261120
    %v110 = vsel %vm108, %v89, 0
    %112 = vmatprep.subr.bf16.mxu0 0
    %113 = vmatpush1.bf16.msra.mxu0 %v104
    %114 = vmatprep.subr.bf16.mxu0 0
    %115 = vmatpush1.bf16.msra.mxu0 %v105
    %116 = vmatprep.subr.bf16.mxu0 0
    %117 = vmatpush1.bf16.msra.mxu0 0
    %118 = vmatprep.subr.bf16.mxu0 0
    %119 = vmatpush1.bf16.msra.mxu0 0
    %120 = vmatprep.subr.bf16.mxu0 0
    %121 = vmatpush1.bf16.msra.mxu0 0
    %122 = vmatprep.subr.bf16.mxu0 0
    %123 = vmatpush1.bf16.msra.mxu0 0
    %124 = vmatprep.subr.bf16.mxu0 0
    %125 = vmatpush1.bf16.msra.mxu0 0
    %126 = vmatprep.subr.bf16.mxu0 0
    %127 = vmatpush1.bf16.msra.mxu0 0
    %128 = vmatprep.subr.bf16.mxu0 0
    %129 = vmatpush1.bf16.msra.mxu0 0
    %130 = vmatprep.subr.bf16.mxu0 0
    %131 = vmatpush1.bf16.msra.mxu0 0
    %132 = vmatprep.subr.bf16.mxu0 0
    %133 = vmatpush1.bf16.msra.mxu0 0
    %134 = vmatprep.subr.bf16.mxu0 0
    %135 = vmatpush1.bf16.msra.mxu0 0
    %136 = vmatprep.subr.bf16.mxu0 0
    %137 = vmatpush1.bf16.msra.mxu0 0
    %138 = vmatprep.subr.bf16.mxu0 0
    %139 = vmatpush1.bf16.msra.mxu0 0
    %140 = vmatprep.subr.bf16.mxu0 0
    %141 = vmatpush1.bf16.msra.mxu0 0
    %142 = vmatprep.subr.bf16.mxu0 0
    %143 = vmatpush1.bf16.msra.mxu0 0
    %144 = vmatprep.mubr.bf16.mxu0 0
    %145 = vmatmul.mubr.bf16.gmra.mrb[0].mxu0 %v110
    %v146 = vpop.f32.mrb[0].mxu0
    %v147 = vadd.f32 %v94, %v146
    %v148 = vpop.f32.mrb[0].mxu0
    %v149 = vpop.f32.mrb[0].mxu0
    %v150 = vpop.f32.mrb[0].mxu0
    %151 = vdwg.mxu0
    %v153 = vrot.slane %v147, 6
    %154 = vrot.lane.b32.xlu0 %v153, 120
    %v155 = vpop.permute.xlu0 %154
    %v157 = vrot.slane %v147, 4
    %158 = vrot.lane.b32.xlu0 %v157, 112
    %v159 = vpop.permute.xlu0 %158
    %v161 = vrot.slane %v147, 2
    %162 = vrot.lane.b32.xlu0 %v161, 104
    %v163 = vpop.permute.xlu0 %162
    %vm165 = vcmask 1041408
    %v166 = vsel %vm165, %v147, %v155
    %vm167 = vcmask 1043456
    %v168 = vsel %vm167, %v166, %v159
    %vm169 = vcmask 1045504
    %v170 = vsel %vm169, %v168, %v163
    %172 = vrot.lane.b32.xlu0 %v147, 120
    %v173 = vpop.permute.xlu0 %172
    %175 = vrot.lane.b32.xlu0 %v153, 112
    %v176 = vpop.permute.xlu0 %175
    %178 = vrot.lane.b32.xlu0 %v157, 104
    %v179 = vpop.permute.xlu0 %178
    %v181 = vsel %vm165, %v161, %v173
    %v182 = vsel %vm167, %v181, %v176
    %v183 = vsel %vm169, %v182, %v179
    %185 = vrot.lane.b32.xlu0 %v161, 120
    %v186 = vpop.permute.xlu0 %185
    %188 = vrot.lane.b32.xlu0 %v147, 112
    %v189 = vpop.permute.xlu0 %188
    %191 = vrot.lane.b32.xlu0 %v153, 104
    %v192 = vpop.permute.xlu0 %191
    %v194 = vsel %vm165, %v157, %v186
    %v195 = vsel %vm167, %v194, %v189
    %v196 = vsel %vm169, %v195, %v192
    %198 = vrot.lane.b32.xlu0 %v157, 120
    %v199 = vpop.permute.xlu0 %198
    %201 = vrot.lane.b32.xlu0 %v161, 112
    %v202 = vpop.permute.xlu0 %201
    %204 = vrot.lane.b32.xlu0 %v147, 104
    %v205 = vpop.permute.xlu0 %204
    %v207 = vsel %vm165, %v153, %v199
    %v208 = vsel %vm167, %v207, %v202
    %v209 = vsel %vm169, %v208, %v205
    %v210 = vpack.c.bf16 %v170, %v170
    %v211 = vpack.c.bf16 %v183, %v183
    %v212 = vpack.c.bf16 %v196, %v196
    %v213 = vpack.c.bf16 %v209, %v209
    %215 = vrot.lane.b32.xlu0 %v210, 96
    %v216 = vpop.permute.xlu0 %215
    %vm217 = vcmask 64512
    %v219 = vsel %vm217, %v210, 0
    %v222 = vsel %vm217, %v216, 0
    %224 = vmatprep.subr.bf16.mxu0 0
    %225 = vmatpush1.bf16.xpose.msra.mxu0 %v222
    %226 = vmatprep.subr.bf16.mxu0 0
    %227 = vmatpush1.bf16.xpose.msra.mxu0 0
    %228 = vmatprep.subr.bf16.mxu0 0
    %229 = vmatpush1.bf16.xpose.msra.mxu0 0
    %230 = vmatprep.subr.bf16.mxu0 0
    %231 = vmatpush1.bf16.xpose.msra.mxu0 0
    %232 = vmatprep.subr.bf16.mxu0 0
    %233 = vmatpush1.bf16.xpose.msra.mxu0 0
    %234 = vmatprep.subr.bf16.mxu0 0
    %235 = vmatpush1.bf16.xpose.msra.mxu0 0
    %236 = vmatprep.subr.bf16.mxu0 0
    %237 = vmatpush1.bf16.xpose.msra.mxu0 0
    %238 = vmatprep.subr.bf16.mxu0 0
    %239 = vmatpush1.bf16.xpose.msra.mxu0 0
    %240 = vmatprep.subr.bf16.mxu0 0
    %241 = vmatpush1.bf16.xpose.msra.mxu0 0
    %242 = vmatprep.subr.bf16.mxu0 0
    %243 = vmatpush1.bf16.xpose.msra.mxu0 0
    %244 = vmatprep.subr.bf16.mxu0 0
    %245 = vmatpush1.bf16.xpose.msra.mxu0 0
    %246 = vmatprep.subr.bf16.mxu0 0
    %247 = vmatpush1.bf16.xpose.msra.mxu0 0
    %248 = vmatprep.subr.bf16.mxu0 0
    %249 = vmatpush1.bf16.xpose.msra.mxu0 0
    %250 = vmatprep.subr.bf16.mxu0 0
    %251 = vmatpush1.bf16.xpose.msra.mxu0 0
    %252 = vmatprep.subr.bf16.mxu0 0
    %253 = vmatpush1.bf16.xpose.msra.mxu0 0
    %254 = vmatprep.subr.bf16.mxu0 0
    %255 = vmatpush1.bf16.xpose.msra.mxu0 0
    %256 = vmatprep.mubr.bf16.mxu0 0
    %257 = vmatmul.mubr.bf16.gmra.mrb[0].mxu0 %v219
    %v258 = vpop.f32.mrb[0].mxu0
    %v259 = vadd.f32 0.0, %v258
    %v260 = vpop.f32.mrb[0].mxu0
    %v261 = vpop.f32.mrb[0].mxu0
    %v262 = vpop.f32.mrb[0].mxu0
    %263 = vdwg.mxu0
    %265 = vrot.lane.b32.xlu0 %v211, 96
    %v266 = vpop.permute.xlu0 %265
    %v268 = vsel %vm217, %v211, 0
    %v271 = vsel %vm217, %v266, 0
    %273 = vmatprep.subr.bf16.mxu0 0
    %274 = vmatpush1.bf16.xpose.msra.mxu0 %v271
    %275 = vmatprep.subr.bf16.mxu0 0
    %276 = vmatpush1.bf16.xpose.msra.mxu0 0
    %277 = vmatprep.subr.bf16.mxu0 0
    %278 = vmatpush1.bf16.xpose.msra.mxu0 0
    %279 = vmatprep.subr.bf16.mxu0 0
    %280 = vmatpush1.bf16.xpose.msra.mxu0 0
    %281 = vmatprep.subr.bf16.mxu0 0
    %282 = vmatpush1.bf16.xpose.msra.mxu0 0
    %283 = vmatprep.subr.bf16.mxu0 0
    %284 = vmatpush1.bf16.xpose.msra.mxu0 0
    %285 = vmatprep.subr.bf16.mxu0 0
    %286 = vmatpush1.bf16.xpose.msra.mxu0 0
    %287 = vmatprep.subr.bf16.mxu0 0
    %288 = vmatpush1.bf16.xpose.msra.mxu0 0
    %289 = vmatprep.subr.bf16.mxu0 0
    %290 = vmatpush1.bf16.xpose.msra.mxu0 0
    %291 = vmatprep.subr.bf16.mxu0 0
    %292 = vmatpush1.bf16.xpose.msra.mxu0 0
    %293 = vmatprep.subr.bf16.mxu0 0
    %294 = vmatpush1.bf16.xpose.msra.mxu0 0
    %295 = vmatprep.subr.bf16.mxu0 0
    %296 = vmatpush1.bf16.xpose.msra.mxu0 0
    %297 = vmatprep.subr.bf16.mxu0 0
    %298 = vmatpush1.bf16.xpose.msra.mxu0 0
    %299 = vmatprep.subr.bf16.mxu0 0
    %300 = vmatpush1.bf16.xpose.msra.mxu0 0
    %301 = vmatprep.subr.bf16.mxu0 0
    %302 = vmatpush1.bf16.xpose.msra.mxu0 0
    %303 = vmatprep.subr.bf16.mxu0 0
    %304 = vmatpush1.bf16.xpose.msra.mxu0 0
    %305 = vmatprep.mubr.bf16.mxu0 0
    %306 = vmatmul.mubr.bf16.gmra.mrb[0].mxu0 %v268
    %v307 = vpop.f32.mrb[0].mxu0
    %v308 = vadd.f32 0.0, %v307
    %v309 = vpop.f32.mrb[0].mxu0
    %v310 = vpop.f32.mrb[0].mxu0
    %v311 = vpop.f32.mrb[0].mxu0
    %312 = vdwg.mxu0
    %314 = vrot.lane.b32.xlu0 %v212, 96
    %v315 = vpop.permute.xlu0 %314
    %v317 = vsel %vm217, %v212, 0
    %v320 = vsel %vm217, %v315, 0
    %322 = vmatprep.subr.bf16.mxu0 0
    %323 = vmatpush1.bf16.xpose.msra.mxu0 %v320
    %324 = vmatprep.subr.bf16.mxu0 0
    %325 = vmatpush1.bf16.xpose.msra.mxu0 0
    %326 = vmatprep.subr.bf16.mxu0 0
    %327 = vmatpush1.bf16.xpose.msra.mxu0 0
    %328 = vmatprep.subr.bf16.mxu0 0
    %329 = vmatpush1.bf16.xpose.msra.mxu0 0
    %330 = vmatprep.subr.bf16.mxu0 0
    %331 = vmatpush1.bf16.xpose.msra.mxu0 0
    %332 = vmatprep.subr.bf16.mxu0 0
    %333 = vmatpush1.bf16.xpose.msra.mxu0 0
    %334 = vmatprep.subr.bf16.mxu0 0
    %335 = vmatpush1.bf16.xpose.msra.mxu0 0
    %336 = vmatprep.subr.bf16.mxu0 0
    %337 = vmatpush1.bf16.xpose.msra.mxu0 0
    %338 = vmatprep.subr.bf16.mxu0 0
    %339 = vmatpush1.bf16.xpose.msra.mxu0 0
    %340 = vmatprep.subr.bf16.mxu0 0
    %341 = vmatpush1.bf16.xpose.msra.mxu0 0
    %342 = vmatprep.subr.bf16.mxu0 0
    %343 = vmatpush1.bf16.xpose.msra.mxu0 0
    %344 = vmatprep.subr.bf16.mxu0 0
    %345 = vmatpush1.bf16.xpose.msra.mxu0 0
    %346 = vmatprep.subr.bf16.mxu0 0
    %347 = vmatpush1.bf16.xpose.msra.mxu0 0
    %348 = vmatprep.subr.bf16.mxu0 0
    %349 = vmatpush1.bf16.xpose.msra.mxu0 0
    %350 = vmatprep.subr.bf16.mxu0 0
    %351 = vmatpush1.bf16.xpose.msra.mxu0 0
    %352 = vmatprep.subr.bf16.mxu0 0
    %353 = vmatpush1.bf16.xpose.msra.mxu0 0
    %354 = vmatprep.mubr.bf16.mxu0 0
    %355 = vmatmul.mubr.bf16.gmra.mrb[0].mxu0 %v317
    %v356 = vpop.f32.mrb[0].mxu0
    %v357 = vadd.f32 0.0, %v356
    %v358 = vpop.f32.mrb[0].mxu0
    %v359 = vpop.f32.mrb[0].mxu0
    %v360 = vpop.f32.mrb[0].mxu0
    %361 = vdwg.mxu0
    %363 = vrot.lane.b32.xlu0 %v213, 96
    %v364 = vpop.permute.xlu0 %363
    %v366 = vsel %vm217, %v213, 0
    %v369 = vsel %vm217, %v364, 0
    %371 = vmatprep.subr.bf16.mxu0 0
    %372 = vmatpush1.bf16.xpose.msra.mxu0 %v369
    %373 = vmatprep.subr.bf16.mxu0 0
    %374 = vmatpush1.bf16.xpose.msra.mxu0 0
    %375 = vmatprep.subr.bf16.mxu0 0
    %376 = vmatpush1.bf16.xpose.msra.mxu0 0
    %377 = vmatprep.subr.bf16.mxu0 0
    %378 = vmatpush1.bf16.xpose.msra.mxu0 0
    %379 = vmatprep.subr.bf16.mxu0 0
    %380 = vmatpush1.bf16.xpose.msra.mxu0 0
    %381 = vmatprep.subr.bf16.mxu0 0
    %382 = vmatpush1.bf16.xpose.msra.mxu0 0
    %383 = vmatprep.subr.bf16.mxu0 0
    %384 = vmatpush1.bf16.xpose.msra.mxu0 0
    %385 = vmatprep.subr.bf16.mxu0 0
    %386 = vmatpush1.bf16.xpose.msra.mxu0 0
    %387 = vmatprep.subr.bf16.mxu0 0
    %388 = vmatpush1.bf16.xpose.msra.mxu0 0
    %389 = vmatprep.subr.bf16.mxu0 0
    %390 = vmatpush1.bf16.xpose.msra.mxu0 0
    %391 = vmatprep.subr.bf16.mxu0 0
    %392 = vmatpush1.bf16.xpose.msra.mxu0 0
    %393 = vmatprep.subr.bf16.mxu0 0
    %394 = vmatpush1.bf16.xpose.msra.mxu0 0
    %395 = vmatprep.subr.bf16.mxu0 0
    %396 = vmatpush1.bf16.xpose.msra.mxu0 0
    %397 = vmatprep.subr.bf16.mxu0 0
    %398 = vmatpush1.bf16.xpose.msra.mxu0 0
    %399 = vmatprep.subr.bf16.mxu0 0
    %400 = vmatpush1.bf16.xpose.msra.mxu0 0
    %401 = vmatprep.subr.bf16.mxu0 0
    %402 = vmatpush1.bf16.xpose.msra.mxu0 0
    %403 = vmatprep.mubr.bf16.mxu0 0
    %404 = vmatmul.mubr.bf16.gmra.mrb[0].mxu0 %v366
    %v405 = vpop.f32.mrb[0].mxu0
    %v406 = vadd.f32 0.0, %v405
    %v407 = vpop.f32.mrb[0].mxu0
    %v408 = vpop.f32.mrb[0].mxu0
    %v409 = vpop.f32.mrb[0].mxu0
    %410 = vdwg.mxu0
    %v411 = vmul.f32 %v259, 0.35355338
    %v412 = vmul.f32 %v308, 0.35355338
    %v413 = vmul.f32 %v357, 0.35355338
    %v414 = vmul.f32 %v406, 0.35355338
    %v415 = vsel %vm217, %v411, -inf
    %416 = vmax.xlane.f32.xlu0 %v415
    %v417 = vpop.xlane.xlu0 %416
    %v418 = vsel %vm217, %v412, -inf
    %419 = vmax.xlane.f32.xlu0 %v418
    %v420 = vpop.xlane.xlu0 %419
    %v421 = vsel %vm217, %v413, -inf
    %422 = vmax.xlane.f32.xlu0 %v421
    %v423 = vpop.xlane.xlu0 %422
    %v424 = vsel %vm217, %v414, -inf
    %425 = vmax.xlane.f32.xlu0 %v424
    %v426 = vpop.xlane.xlu0 %425
    %v427 = vsub.f32 %v411, %v417
    %v428 = vsub.f32 %v412, %v420
    %v429 = vsub.f32 %v413, %v423
    %v430 = vsub.f32 %v414, %v426
    %v431 = vmul.f32 %v427, 1.442695
    %v432 = vpow.pop %v431
    %v433 = vmul.f32 %v428, 1.442695
    %v434 = vpow.pop %v433
    %v435 = vmul.f32 %v429, 1.442695
    %v436 = vpow.pop %v435
    %v437 = vmul.f32 %v430, 1.442695
    %v438 = vpow.pop %v437
    %v439 = vsel %vm217, %v432, 0.0
    %440 = vadd.xlane.f32.xlu0 %v439
    %v441 = vpop.xlane.xlu0 %440
    %v442 = vsel %vm217, %v434, 0.0
    %443 = vadd.xlane.f32.xlu0 %v442
    %v444 = vpop.xlane.xlu0 %443
    %v445 = vsel %vm217, %v436, 0.0
    %446 = vadd.xlane.f32.xlu0 %v445
    %v447 = vpop.xlane.xlu0 %446
    %v448 = vsel %vm217, %v438, 0.0
    %449 = vadd.xlane.f32.xlu0 %v448
    %v450 = vpop.xlane.xlu0 %449
    %v451 = vrcp.pop %v441
    %v452 = vmul.f32 %v432, %v451
    %v453 = vrcp.pop %v444
    %v454 = vmul.f32 %v434, %v453
    %v455 = vrcp.pop %v447
    %v456 = vmul.f32 %v436, %v455
    %v457 = vrcp.pop %v450
    %v458 = vmul.f32 %v438, %v457
    %v459 = vpack.c.bf16 %v452, %v452
    %v460 = vpack.c.bf16 %v454, %v454
    %v461 = vpack.c.bf16 %v456, %v456
    %v462 = vpack.c.bf16 %v458, %v458
    %463 = vrot.lane.b32.xlu0 %v210, 64
    %v464 = vpop.permute.xlu0 %463
    %v466 = vsel %vm217, %v459, 0
    %v469 = vsel %vm167, %v464, 0
    %471 = vmatprep.subr.bf16.mxu0 0
    %472 = vmatpush1.bf16.msra.mxu0 %v469
    %473 = vmatprep.subr.bf16.mxu0 0
    %474 = vmatpush1.bf16.msra.mxu0 0
    %475 = vmatprep.subr.bf16.mxu0 0
    %476 = vmatpush1.bf16.msra.mxu0 0
    %477 = vmatprep.subr.bf16.mxu0 0
    %478 = vmatpush1.bf16.msra.mxu0 0
    %479 = vmatprep.subr.bf16.mxu0 0
    %480 = vmatpush1.bf16.msra.mxu0 0
    %481 = vmatprep.subr.bf16.mxu0 0
    %482 = vmatpush1.bf16.msra.mxu0 0
    %483 = vmatprep.subr.bf16.mxu0 0
    %484 = vmatpush1.bf16.msra.mxu0 0
    %485 = vmatprep.subr.bf16.mxu0 0
    %486 = vmatpush1.bf16.msra.mxu0 0
    %487 = vmatprep.subr.bf16.mxu0 0
    %488 = vmatpush1.bf16.msra.mxu0 0
    %489 = vmatprep.subr.bf16.mxu0 0
    %490 = vmatpush1.bf16.msra.mxu0 0
    %491 = vmatprep.subr.bf16.mxu0 0
    %492 = vmatpush1.bf16.msra.mxu0 0
    %493 = vmatprep.subr.bf16.mxu0 0
    %494 = vmatpush1.bf16.msra.mxu0 0
    %495 = vmatprep.subr.bf16.mxu0 0
    %496 = vmatpush1.bf16.msra.mxu0 0
    %497 = vmatprep.subr.bf16.mxu0 0
    %498 = vmatpush1.bf16.msra.mxu0 0
    %499 = vmatprep.subr.bf16.mxu0 0
    %500 = vmatpush1.bf16.msra.mxu0 0
    %501 = vmatprep.subr.bf16.mxu0 0
    %502 = vmatpush1.bf16.msra.mxu0 0
    %503 = vmatprep.mubr.bf16.mxu0 0
    %504 = vmatmul.mubr.bf16.gmra.mrb[0].mxu0 %v466
    %v505 = vpop.f32.mrb[0].mxu0
    %v506 = vadd.f32 0.0, %v505
    %v507 = vpop.f32.mrb[0].mxu0
    %v508 = vpop.f32.mrb[0].mxu0
    %v509 = vpop.f32.mrb[0].mxu0
    %510 = vdwg.mxu0
    %511 = vrot.lane.b32.xlu0 %v211, 64
    %v512 = vpop.permute.xlu0 %511
    %v514 = vsel %vm217, %v460, 0
    %v517 = vsel %vm167, %v512, 0
    %519 = vmatprep.subr.bf16.mxu0 0
    %520 = vmatpush1.bf16.msra.mxu0 %v517
    %521 = vmatprep.subr.bf16.mxu0 0
    %522 = vmatpush1.bf16.msra.mxu0 0
    %523 = vmatprep.subr.bf16.mxu0 0
    %524 = vmatpush1.bf16.msra.mxu0 0
    %525 = vmatprep.subr.bf16.mxu0 0
    %526 = vmatpush1.bf16.msra.mxu0 0
    %527 = vmatprep.subr.bf16.mxu0 0
    %528 = vmatpush1.bf16.msra.mxu0 0
    %529 = vmatprep.subr.bf16.mxu0 0
    %530 = vmatpush1.bf16.msra.mxu0 0
    %531 = vmatprep.subr.bf16.mxu0 0
    %532 = vmatpush1.bf16.msra.mxu0 0
    %533 = vmatprep.subr.bf16.mxu0 0
    %534 = vmatpush1.bf16.msra.mxu0 0
    %535 = vmatprep.subr.bf16.mxu0 0
    %536 = vmatpush1.bf16.msra.mxu0 0
    %537 = vmatprep.subr.bf16.mxu0 0
    %538 = vmatpush1.bf16.msra.mxu0 0
    %539 = vmatprep.subr.bf16.mxu0 0
    %540 = vmatpush1.bf16.msra.mxu0 0
    %541 = vmatprep.subr.bf16.mxu0 0
    %542 = vmatpush1.bf16.msra.mxu0 0
    %543 = vmatprep.subr.bf16.mxu0 0
    %544 = vmatpush1.bf16.msra.mxu0 0
    %545 = vmatprep.subr.bf16.mxu0 0
    %546 = vmatpush1.bf16.msra.mxu0 0
    %547 = vmatprep.subr.bf16.mxu0 0
    %548 = vmatpush1.bf16.msra.mxu0 0
    %549 = vmatprep.subr.bf16.mxu0 0
    %550 = vmatpush1.bf16.msra.mxu0 0
    %551 = vmatprep.mubr.bf16.mxu0 0
    %552 = vmatmul.mubr.bf16.gmra.mrb[0].mxu0 %v514
    %v553 = vpop.f32.mrb[0].mxu0
    %v554 = vadd.f32 0.0, %v553
    %v555 = vpop.f32.mrb[0].mxu0
    %v556 = vpop.f32.mrb[0].mxu0
    %v557 = vpop.f32.mrb[0].mxu0
    %558 = vdwg.mxu0
    %559 = vrot.lane.b32.xlu0 %v212, 64
    %v560 = vpop.permute.xlu0 %559
    %v562 = vsel %vm217, %v461, 0
    %v565 = vsel %vm167, %v560, 0
    %567 = vmatprep.subr.bf16.mxu0 0
    %568 = vmatpush1.bf16.msra.mxu0 %v565
    %569 = vmatprep.subr.bf16.mxu0 0
    %570 = vmatpush1.bf16.msra.mxu0 0
    %571 = vmatprep.subr.bf16.mxu0 0
    %572 = vmatpush1.bf16.msra.mxu0 0
    %573 = vmatprep.subr.bf16.mxu0 0
    %574 = vmatpush1.bf16.msra.mxu0 0
    %575 = vmatprep.subr.bf16.mxu0 0
    %576 = vmatpush1.bf16.msra.mxu0 0
    %577 = vmatprep.subr.bf16.mxu0 0
    %578 = vmatpush1.bf16.msra.mxu0 0
    %579 = vmatprep.subr.bf16.mxu0 0
    %580 = vmatpush1.bf16.msra.mxu0 0
    %581 = vmatprep.subr.bf16.mxu0 0
    %582 = vmatpush1.bf16.msra.mxu0 0
    %583 = vmatprep.subr.bf16.mxu0 0
    %584 = vmatpush1.bf16.msra.mxu0 0
    %585 = vmatprep.subr.bf16.mxu0 0
    %586 = vmatpush1.bf16.msra.mxu0 0
    %587 = vmatprep.subr.bf16.mxu0 0
    %588 = vmatpush1.bf16.msra.mxu0 0
    %589 = vmatprep.subr.bf16.mxu0 0
    %590 = vmatpush1.bf16.msra.mxu0 0
    %591 = vmatprep.subr.bf16.mxu0 0
    %592 = vmatpush1.bf16.msra.mxu0 0
    %593 = vmatprep.subr.bf16.mxu0 0
    %594 = vmatpush1.bf16.msra.mxu0 0
    %595 = vmatprep.subr.bf16.mxu0 0
    %596 = vmatpush1.bf16.msra.mxu0 0
    %597 = vmatprep.subr.bf16.mxu0 0
    %598 = vmatpush1.bf16.msra.mxu0 0
    %599 = vmatprep.mubr.bf16.mxu0 0
    %600 = vmatmul.mubr.bf16.gmra.mrb[0].mxu0 %v562
    %v601 = vpop.f32.mrb[0].mxu0
    %v602 = vadd.f32 0.0, %v601
    %v603 = vpop.f32.mrb[0].mxu0
    %v604 = vpop.f32.mrb[0].mxu0
    %v605 = vpop.f32.mrb[0].mxu0
    %606 = vdwg.mxu0
    %607 = vrot.lane.b32.xlu0 %v213, 64
    %v608 = vpop.permute.xlu0 %607
    %v610 = vsel %vm217, %v462, 0
    %v613 = vsel %vm167, %v608, 0
    %615 = vmatprep.subr.bf16.mxu0 0
    %616 = vmatpush1.bf16.msra.mxu0 %v613
    %617 = vmatprep.subr.bf16.mxu0 0
    %618 = vmatpush1.bf16.msra.mxu0 0
    %619 = vmatprep.subr.bf16.mxu0 0
    %620 = vmatpush1.bf16.msra.mxu0 0
    %621 = vmatprep.subr.bf16.mxu0 0
    %622 = vmatpush1.bf16.msra.mxu0 0
    %623 = vmatprep.subr.bf16.mxu0 0
    %624 = vmatpush1.bf16.msra.mxu0 0
    %625 = vmatprep.subr.bf16.mxu0 0
    %626 = vmatpush1.bf16.msra.mxu0 0
    %627 = vmatprep.subr.bf16.mxu0 0
    %628 = vmatpush1.bf16.msra.mxu0 0
    %629 = vmatprep.subr.bf16.mxu0 0
    %630 = vmatpush1.bf16.msra.mxu0 0
    %631 = vmatprep.subr.bf16.mxu0 0
    %632 = vmatpush1.bf16.msra.mxu0 0
    %633 = vmatprep.subr.bf16.mxu0 0
    %634 = vmatpush1.bf16.msra.mxu0 0
    %635 = vmatprep.subr.bf16.mxu0 0
    %636 = vmatpush1.bf16.msra.mxu0 0
    %637 = vmatprep.subr.bf16.mxu0 0
    %638 = vmatpush1.bf16.msra.mxu0 0
    %639 = vmatprep.subr.bf16.mxu0 0
    %640 = vmatpush1.bf16.msra.mxu0 0
    %641 = vmatprep.subr.bf16.mxu0 0
    %642 = vmatpush1.bf16.msra.mxu0 0
    %643 = vmatprep.subr.bf16.mxu0 0
    %644 = vmatpush1.bf16.msra.mxu0 0
    %645 = vmatprep.subr.bf16.mxu0 0
    %646 = vmatpush1.bf16.msra.mxu0 0
    %647 = vmatprep.mubr.bf16.mxu0 0
    %648 = vmatmul.mubr.bf16.gmra.mrb[0].mxu0 %v610
    %v649 = vpop.f32.mrb[0].mxu0
    %v650 = vadd.f32 0.0, %v649
    %v651 = vpop.f32.mrb[0].mxu0
    %v652 = vpop.f32.mrb[0].mxu0
    %v653 = vpop.f32.mrb[0].mxu0
    %654 = vdwg.mxu0
    %v656 = vrot.slane %v506, 2
    %657 = vrot.lane.b32.xlu0 %v656, 8
    %v658 = vpop.permute.xlu0 %657
    %v660 = vrot.slane %v506, 4
    %661 = vrot.lane.b32.xlu0 %v660, 16
    %v662 = vpop.permute.xlu0 %661
    %v664 = vrot.slane %v506, 6
    %665 = vrot.lane.b32.xlu0 %v664, 24
    %v666 = vpop.permute.xlu0 %665
    %v668 = vsel %vm217, %v506, %v658
    %vm669 = vcmask 130048
    %v670 = vsel %vm669, %v668, %v662
    %vm671 = vcmask 195584
    %v672 = vsel %vm671, %v670, %v666
    %v674 = vrot.slane %v554, 2
    %675 = vrot.lane.b32.xlu0 %v674, 8
    %v676 = vpop.permute.xlu0 %675
    %v678 = vrot.slane %v554, 4
    %679 = vrot.lane.b32.xlu0 %v678, 16
    %v680 = vpop.permute.xlu0 %679
    %v682 = vrot.slane %v554, 6
    %683 = vrot.lane.b32.xlu0 %v682, 24
    %v684 = vpop.permute.xlu0 %683
    %v686 = vsel %vm217, %v554, %v676
    %v687 = vsel %vm669, %v686, %v680
    %v688 = vsel %vm671, %v687, %v684
    %v690 = vrot.slane %v602, 2
    %691 = vrot.lane.b32.xlu0 %v690, 8
    %v692 = vpop.permute.xlu0 %691
    %v694 = vrot.slane %v602, 4
    %695 = vrot.lane.b32.xlu0 %v694, 16
    %v696 = vpop.permute.xlu0 %695
    %v698 = vrot.slane %v602, 6
    %699 = vrot.lane.b32.xlu0 %v698, 24
    %v700 = vpop.permute.xlu0 %699
    %v702 = vsel %vm217, %v602, %v692
    %v703 = vsel %vm669, %v702, %v696
    %v704 = vsel %vm671, %v703, %v700
    %v706 = vrot.slane %v650, 2
    %707 = vrot.lane.b32.xlu0 %v706, 8
    %v708 = vpop.permute.xlu0 %707
    %v710 = vrot.slane %v650, 4
    %711 = vrot.lane.b32.xlu0 %v710, 16
    %v712 = vpop.permute.xlu0 %711
    %v714 = vrot.slane %v650, 6
    %715 = vrot.lane.b32.xlu0 %v714, 24
    %v716 = vpop.permute.xlu0 %715
    %v718 = vsel %vm217, %v650, %v708
    %v719 = vsel %vm669, %v718, %v712
    %v720 = vsel %vm671, %v719, %v716
    %v722 = vrot.slane %v688, 6
    %v725 = vrot.slane %v704, 4
    %v728 = vrot.slane %v720, 2
    %v730 = vsel %vm165, %v672, %v722
    %v731 = vsel %vm167, %v730, %v725
    %v732 = vsel %vm169, %v731, %v728
    %v734 = vlaneseq
    %v735 = vshrl.u32 %v734, 7
    %v736 = vsub.s32 0, %v735
    %v737 = vrot.slane %v69, %v736
    %v739 = vadd.f32 %v88, %v737
    %v740 = vpack.c.bf16 %v732, %v732
    %v745 = vunpack.c.l.b16 %v65
    %v746 = vunpack.c.l.b16 %v66
    %v747 = vunpack.c.l.b16 %v67
    %v748 = vunpack.c.l.b16 %v68
    %v749 = vpack.c.b16 %v746, %v745
    %v750 = vpack.c.b16 %v748, %v747
    %v754 = vsel %vm108, %v740, 0
    %756 = vmatprep.subr.bf16.mxu0 0
    %757 = vmatpush1.bf16.msra.mxu0 %v749
    %758 = vmatprep.subr.bf16.mxu0 0
    %759 = vmatpush1.bf16.msra.mxu0 %v750
    %760 = vmatprep.subr.bf16.mxu0 0
    %761 = vmatpush1.bf16.msra.mxu0 0
    %762 = vmatprep.subr.bf16.mxu0 0
    %763 = vmatpush1.bf16.msra.mxu0 0
    %764 = vmatprep.subr.bf16.mxu0 0
    %765 = vmatpush1.bf16.msra.mxu0 0
    %766 = vmatprep.subr.bf16.mxu0 0
    %767 = vmatpush1.bf16.msra.mxu0 0
    %768 = vmatprep.subr.bf16.mxu0 0
    %769 = vmatpush1.bf16.msra.mxu0 0
    %770 = vmatprep.subr.bf16.mxu0 0
    %771 = vmatpush1.bf16.msra.mxu0 0
    %772 = vmatprep.subr.bf16.mxu0 0
    %773 = vmatpush1.bf16.msra.mxu0 0
    %774 = vmatprep.subr.bf16.mxu0 0
    %775 = vmatpush1.bf16.msra.mxu0 0
    %776 = vmatprep.subr.bf16.mxu0 0
    %777 = vmatpush1.bf16.msra.mxu0 0
    %778 = vmatprep.subr.bf16.mxu0 0
    %779 = vmatpush1.bf16.msra.mxu0 0
    %780 = vmatprep.subr.bf16.mxu0 0
    %781 = vmatpush1.bf16.msra.mxu0 0
    %782 = vmatprep.subr.bf16.mxu0 0
    %783 = vmatpush1.bf16.msra.mxu0 0
    %784 = vmatprep.subr.bf16.mxu0 0
    %785 = vmatpush1.bf16.msra.mxu0 0
    %786 = vmatprep.subr.bf16.mxu0 0
    %787 = vmatpush1.bf16.msra.mxu0 0
    %788 = vmatprep.mubr.bf16.mxu0 0
    %789 = vmatmul.mubr.bf16.gmra.mrb[0].mxu0 %v754
    %v790 = vpop.f32.mrb[0].mxu0
    %v791 = vadd.f32 0.0, %v790
    %v792 = vpop.f32.mrb[0].mxu0
    %v793 = vpop.f32.mrb[0].mxu0
    %v794 = vpop.f32.mrb[0].mxu0
    %795 = vdwg.mxu0
    %v796 = vadd.f32 %v739, %v791
    %v797 = vsel %vm108, %v796, 0.0
    %798 = vadd.xlane.f32.xlu0 %v797
    %v799 = vpop.xlane.xlu0 %798
    %v800 = vrcp.pop 32.0
    %v801 = vmul.f32 %v799, %v800
    %v802 = vsub.f32 %v796, %v801
    %v803 = vmul.f32 %v802, %v802
    %v804 = vsel %vm108, %v803, 0.0
    %805 = vadd.xlane.f32.xlu0 %v804
    %v806 = vpop.xlane.xlu0 %805
    %v807 = vmul.f32 %v806, %v800
    %v808 = vadd.f32 %v807, 1e-05
    %v809 = vrsqrt.pop %v808
    %v810 = vmul.f32 %v802, %v809
    %v812 = vlaneseq
    %v813 = vshrl.u32 %v812, 7
    %v814 = vsub.s32 0, %v813
    %v815 = vrot.slane %v70, %v814
    %v817 = vmul.f32 %v810, %v815
    %v819 = vlaneseq
    %v820 = vshrl.u32 %v819, 7
    %v821 = vsub.s32 0, %v820
    %v822 = vrot.slane %v71, %v821
    %v824 = vadd.f32 %v817, %v822
    %v825 = vpack.c.bf16 %v824, %v824
    %v827 = vlaneseq
    %v828 = vshrl.u32 %v827, 7
    %v829 = vsub.s32 0, %v828
    %v830 = vrot.slane %v76, %v829
    %v836 = vunpack.c.l.b16 %v72
    %v837 = vunpack.c.l.b16 %v73
    %v838 = vunpack.c.l.b16 %v74
    %v839 = vunpack.c.l.b16 %v75
    %v840 = vpack.c.b16 %v837, %v836
    %v841 = vpack.c.b16 %v839, %v838
    %v845 = vsel %vm108, %v825, 0
    %847 = vmatprep.subr.bf16.mxu0 0
    %848 = vmatpush1.bf16.msra.mxu0 %v840
    %849 = vmatprep.subr.bf16.mxu0 0
    %850 = vmatpush1.bf16.msra.mxu0 %v841
    %851 = vmatprep.subr.bf16.mxu0 0
    %852 = vmatpush1.bf16.msra.mxu0 0
    %853 = vmatprep.subr.bf16.mxu0 0
    %854 = vmatpush1.bf16.msra.mxu0 0
    %855 = vmatprep.subr.bf16.mxu0 0
    %856 = vmatpush1.bf16.msra.mxu0 0
    %857 = vmatprep.subr.bf16.mxu0 0
    %858 = vmatpush1.bf16.msra.mxu0 0
    %859 = vmatprep.subr.bf16.mxu0 0
    %860 = vmatpush1.bf16.msra.mxu0 0
    %861 = vmatprep.subr.bf16.mxu0 0
    %862 = vmatpush1.bf16.msra.mxu0 0
    %863 = vmatprep.subr.bf16.mxu0 0
    %864 = vmatpush1.bf16.msra.mxu0 0
    %865 = vmatprep.subr.bf16.mxu0 0
    %866 = vmatpush1.bf16.msra.mxu0 0
    %867 = vmatprep.subr.bf16.mxu0 0
    %868 = vmatpush1.bf16.msra.mxu0 0
    %869 = vmatprep.subr.bf16.mxu0 0
    %870 = vmatpush1.bf16.msra.mxu0 0
    %871 = vmatprep.subr.bf16.mxu0 0
    %872 = vmatpush1.bf16.msra.mxu0 0
    %873 = vmatprep.subr.bf16.mxu0 0
    %874 = vmatpush1.bf16.msra.mxu0 0
    %875 = vmatprep.subr.bf16.mxu0 0
    %876 = vmatpush1.bf16.msra.mxu0 0
    %877 = vmatprep.subr.bf16.mxu0 0
    %878 = vmatpush1.bf16.msra.mxu0 0
    %879 = vmatprep.mubr.bf16.mxu0 0
    %880 = vmatmul.mubr.bf16.gmra.mrb[0].mxu0 %v845
    %v881 = vpop.f32.mrb[0].mxu0
    %v882 = vadd.f32 %v830, %v881
    %v883 = vpop.f32.mrb[0].mxu0
    %v884 = vpop.f32.mrb[0].mxu0
    %v885 = vpop.f32.mrb[0].mxu0
    %886 = vdwg.mxu0
    %v887 = vmax.f32 %v882, 0.0
    %v888 = vpack.c.bf16 %v887, %v887
    %v890 = vlaneseq
    %v891 = vshrl.u32 %v890, 7
    %v892 = vsub.s32 0, %v891
    %v893 = vrot.slane %v85, %v892
    %v903 = vunpack.c.l.b16 %v77
    %v904 = vunpack.c.l.b16 %v78
    %v905 = vunpack.c.l.b16 %v79
    %v906 = vunpack.c.l.b16 %v80
    %v907 = vunpack.c.l.b16 %v81
    %v908 = vunpack.c.l.b16 %v82
    %v909 = vunpack.c.l.b16 %v83
    %v910 = vunpack.c.l.b16 %v84
    %v911 = vpack.c.b16 %v904, %v903
    %v912 = vpack.c.b16 %v906, %v905
    %v913 = vpack.c.b16 %v908, %v907
    %v914 = vpack.c.b16 %v910, %v909
    %vm919 = vcmask 523264
    %v921 = vsel %vm919, %v888, 0
    %923 = vmatprep.subr.bf16.mxu0 0
    %924 = vmatpush1.bf16.msra.mxu0 %v911
    %925 = vmatprep.subr.bf16.mxu0 0
    %926 = vmatpush1.bf16.msra.mxu0 %v912
    %927 = vmatprep.subr.bf16.mxu0 0
    %928 = vmatpush1.bf16.msra.mxu0 %v913
    %929 = vmatprep.subr.bf16.mxu0 0
    %930 = vmatpush1.bf16.msra.mxu0 %v914
    %931 = vmatprep.subr.bf16.mxu0 0
    %932 = vmatpush1.bf16.msra.mxu0 0
    %933 = vmatprep.subr.bf16.mxu0 0
    %934 = vmatpush1.bf16.msra.mxu0 0
    %935 = vmatprep.subr.bf16.mxu0 0
    %936 = vmatpush1.bf16.msra.mxu0 0
    %937 = vmatprep.subr.bf16.mxu0 0
    %938 = vmatpush1.bf16.msra.mxu0 0
    %939 = vmatprep.subr.bf16.mxu0 0
    %940 = vmatpush1.bf16.msra.mxu0 0
    %941 = vmatprep.subr.bf16.mxu0 0
    %942 = vmatpush1.bf16.msra.mxu0 0
    %943 = vmatprep.subr.bf16.mxu0 0
    %944 = vmatpush1.bf16.msra.mxu0 0
    %945 = vmatprep.subr.bf16.mxu0 0
    %946 = vmatpush1.bf16.msra.mxu0 0
    %947 = vmatprep.subr.bf16.mxu0 0
    %948 = vmatpush1.bf16.msra.mxu0 0
    %949 = vmatprep.subr.bf16.mxu0 0
    %950 = vmatpush1.bf16.msra.mxu0 0
    %951 = vmatprep.subr.bf16.mxu0 0
    %952 = vmatpush1.bf16.msra.mxu0 0
    %953 = vmatprep.subr.bf16.mxu0 0
    %954 = vmatpush1.bf16.msra.mxu0 0
    %955 = vmatprep.mubr.bf16.mxu0 0
    %956 = vmatmul.mubr.bf16.gmra.mrb[0].mxu0 %v921
    %v957 = vpop.f32.mrb[0].mxu0
    %v958 = vadd.f32 %v893, %v957
    %v959 = vpop.f32.mrb[0].mxu0
    %v960 = vpop.f32.mrb[0].mxu0
    %v961 = vpop.f32.mrb[0].mxu0
    %962 = vdwg.mxu0
    %v963 = vadd.f32 %v958, %v824
    %v964 = vsel %vm108, %v963, 0.0
    %965 = vadd.xlane.f32.xlu0 %v964
    %v966 = vpop.xlane.xlu0 %965
    %v967 = vmul.f32 %v966, %v800
    %v968 = vsub.f32 %v963, %v967
    %v969 = vmul.f32 %v968, %v968
    %v970 = vsel %vm108, %v969, 0.0
    %971 = vadd.xlane.f32.xlu0 %v970
    %v972 = vpop.xlane.xlu0 %971
    %v973 = vmul.f32 %v972, %v800
    %v974 = vadd.f32 %v973, 1e-05
    %v975 = vrsqrt.pop %v974
    %v976 = vmul.f32 %v968, %v975
    %v978 = vlaneseq
    %v979 = vshrl.u32 %v978, 7
    %v980 = vsub.s32 0, %v979
    %v981 = vrot.slane %v86, %v980
    %v983 = vmul.f32 %v976, %v981
    %v985 = vlaneseq
    %v986 = vshrl.u32 %v985, 7
    %v987 = vsub.s32 0, %v986
    %v988 = vrot.slane %v87, %v987
    %v990 = vadd.f32 %v983, %v988
    %991 = vst.msk [vmem:[#allocation5] sm:$0xff] %vm108, %v990
    %s992 = scalar_lea.vmem %s0, 8
    %v993 = vld [vmem:[%s992] sm:$0xff]
    %v994 = vpack.c.bf16 %v993, %v993
    %v996 = vsel %vm108, %v994, 0
    %998 = vmatprep.subr.bf16.mxu0 0
    %999 = vmatpush1.bf16.msra.mxu0 %v104
    %1000 = vmatprep.subr.bf16.mxu0 0
    %1001 = vmatpush1.bf16.msra.mxu0 %v105
    %1002 = vmatprep.subr.bf16.mxu0 0
    %1003 = vmatpush1.bf16.msra.mxu0 0
    %1004 = vmatprep.subr.bf16.mxu0 0
    %1005 = vmatpush1.bf16.msra.mxu0 0
    %1006 = vmatprep.subr.bf16.mxu0 0
    %1007 = vmatpush1.bf16.msra.mxu0 0
    %1008 = vmatprep.subr.bf16.mxu0 0
    %1009 = vmatpush1.bf16.msra.mxu0 0
    %1010 = vmatprep.subr.bf16.mxu0 0
    %1011 = vmatpush1.bf16.msra.mxu0 0
    %1012 = vmatprep.subr.bf16.mxu0 0
    %1013 = vmatpush1.bf16.msra.mxu0 0
    %1014 = vmatprep.subr.bf16.mxu0 0
    %1015 = vmatpush1.bf16.msra.mxu0 0
    %1016 = vmatprep.subr.bf16.mxu0 0
    %1017 = vmatpush1.bf16.msra.mxu0 0
    %1018 = vmatprep.subr.bf16.mxu0 0
    %1019 = vmatpush1.bf16.msra.mxu0 0
    %1020 = vmatprep.subr.bf16.mxu0 0
    %1021 = vmatpush1.bf16.msra.mxu0 0
    %1022 = vmatprep.subr.bf16.mxu0 0
    %1023 = vmatpush1.bf16.msra.mxu0 0
    %1024 = vmatprep.subr.bf16.mxu0 0
    %1025 = vmatpush1.bf16.msra.mxu0 0
    %1026 = vmatprep.subr.bf16.mxu0 0
    %1027 = vmatpush1.bf16.msra.mxu0 0
    %1028 = vmatprep.subr.bf16.mxu0 0
    %1029 = vmatpush1.bf16.msra.mxu0 0
    %1030 = vmatprep.mubr.bf16.mxu0 0
    %1031 = vmatmul.mubr.bf16.gmra.mrb[0].mxu0 %v996
    %v1032 = vpop.f32.mrb[0].mxu0
    %v1033 = vadd.f32 %v94, %v1032
    %v1034 = vpop.f32.mrb[0].mxu0
    %v1035 = vpop.f32.mrb[0].mxu0
    %v1036 = vpop.f32.mrb[0].mxu0
    %1037 = vdwg.mxu0
    %v1039 = vrot.slane %v1033, 6
    %1040 = vrot.lane.b32.xlu0 %v1039, 120
    %v1041 = vpop.permute.xlu0 %1040
    %v1043 = vrot.slane %v1033, 4
    %1044 = vrot.lane.b32.xlu0 %v1043, 112
    %v1045 = vpop.permute.xlu0 %1044
    %v1047 = vrot.slane %v1033, 2
    %1048 = vrot.lane.b32.xlu0 %v1047, 104
    %v1049 = vpop.permute.xlu0 %1048
    %v1051 = vsel %vm165, %v1033, %v1041
    %v1052 = vsel %vm167, %v1051, %v1045
    %v1053 = vsel %vm169, %v1052, %v1049
    %1055 = vrot.lane.b32.xlu0 %v1033, 120
    %v1056 = vpop.permute.xlu0 %1055
    %1058 = vrot.lane.b32.xlu0 %v1039, 112
    %v1059 = vpop.permute.xlu0 %1058
    %1061 = vrot.lane.b32.xlu0 %v1043, 104
    %v1062 = vpop.permute.xlu0 %1061
    %v1064 = vsel %vm165, %v1047, %v1056
    %v1065 = vsel %vm167, %v1064, %v1059
    %v1066 = vsel %vm169, %v1065, %v1062
    %1068 = vrot.lane.b32.xlu0 %v1047, 120
    %v1069 = vpop.permute.xlu0 %1068
    %1071 = vrot.lane.b32.xlu0 %v1033, 112
    %v1072 = vpop.permute.xlu0 %1071
    %1074 = vrot.lane.b32.xlu0 %v1039, 104
    %v1075 = vpop.permute.xlu0 %1074
    %v1077 = vsel %vm165, %v1043, %v1069
    %v1078 = vsel %vm167, %v1077, %v1072
    %v1079 = vsel %vm169, %v1078, %v1075
    %1081 = vrot.lane.b32.xlu0 %v1043, 120
    %v1082 = vpop.permute.xlu0 %1081
    %1084 = vrot.lane.b32.xlu0 %v1047, 112
    %v1085 = vpop.permute.xlu0 %1084
    %1087 = vrot.lane.b32.xlu0 %v1033, 104
    %v1088 = vpop.permute.xlu0 %1087
    %v1090 = vsel %vm165, %v1039, %v1082
    %v1091 = vsel %vm167, %v1090, %v1085
    %v1092 = vsel %vm169, %v1091, %v1088
    %v1093 = vpack.c.bf16 %v1053, %v1053
    %v1094 = vpack.c.bf16 %v1066, %v1066
    %v1095 = vpack.c.bf16 %v1079, %v1079
    %v1096 = vpack.c.bf16 %v1092, %v1092
    %1098 = vrot.lane.b32.xlu0 %v1093, 96
    %v1099 = vpop.permute.xlu0 %1098
    %v1101 = vsel %vm217, %v1093, 0
    %v1104 = vsel %vm217, %v1099, 0
    %1106 = vmatprep.subr.bf16.mxu0 0
    %1107 = vmatpush1.bf16.xpose.msra.mxu0 %v1104
    %1108 = vmatprep.subr.bf16.mxu0 0
    %1109 = vmatpush1.bf16.xpose.msra.mxu0 0
    %1110 = vmatprep.subr.bf16.mxu0 0
    %1111 = vmatpush1.bf16.xpose.msra.mxu0 0
    %1112 = vmatprep.subr.bf16.mxu0 0
    %1113 = vmatpush1.bf16.xpose.msra.mxu0 0
    %1114 = vmatprep.subr.bf16.mxu0 0
    %1115 = vmatpush1.bf16.xpose.msra.mxu0 0
    %1116 = vmatprep.subr.bf16.mxu0 0
    %1117 = vmatpush1.bf16.xpose.msra.mxu0 0
    %1118 = vmatprep.subr.bf16.mxu0 0
    %1119 = vmatpush1.bf16.xpose.msra.mxu0 0
    %1120 = vmatprep.subr.bf16.mxu0 0
    %1121 = vmatpush1.bf16.xpose.msra.mxu0 0
    %1122 = vmatprep.subr.bf16.mxu0 0
    %1123 = vmatpush1.bf16.xpose.msra.mxu0 0
    %1124 = vmatprep.subr.bf16.mxu0 0
    %1125 = vmatpush1.bf16.xpose.msra.mxu0 0
    %1126 = vmatprep.subr.bf16.mxu0 0
    %1127 = vmatpush1.bf16.xpose.msra.mxu0 0
    %1128 = vmatprep.subr.bf16.mxu0 0
    %1129 = vmatpush1.bf16.xpose.msra.mxu0 0
    %1130 = vmatprep.subr.bf16.mxu0 0
    %1131 = vmatpush1.bf16.xpose.msra.mxu0 0
    %1132 = vmatprep.subr.bf16.mxu0 0
    %1133 = vmatpush1.bf16.xpose.msra.mxu0 0
    %1134 = vmatprep.subr.bf16.mxu0 0
    %1135 = vmatpush1.bf16.xpose.msra.mxu0 0
    %1136 = vmatprep.subr.bf16.mxu0 0
    %1137 = vmatpush1.bf16.xpose.msra.mxu0 0
    %1138 = vmatprep.mubr.bf16.mxu0 0
    %1139 = vmatmul.mubr.bf16.gmra.mrb[0].mxu0 %v1101
    %v1140 = vpop.f32.mrb[0].mxu0
    %v1141 = vadd.f32 0.0, %v1140
    %v1142 = vpop.f32.mrb[0].mxu0
    %v1143 = vpop.f32.mrb[0].mxu0
    %v1144 = vpop.f32.mrb[0].mxu0
    %1145 = vdwg.mxu0
    %1147 = vrot.lane.b32.xlu0 %v1094, 96
    %v1148 = vpop.permute.xlu0 %1147
    %v1150 = vsel %vm217, %v1094, 0
    %v1153 = vsel %vm217, %v1148, 0
    %1155 = vmatprep.subr.bf16.mxu0 0
    %1156 = vmatpush1.bf16.xpose.msra.mxu0 %v1153
    %1157 = vmatprep.subr.bf16.mxu0 0
    %1158 = vmatpush1.bf16.xpose.msra.mxu0 0
    %1159 = vmatprep.subr.bf16.mxu0 0
    %1160 = vmatpush1.bf16.xpose.msra.mxu0 0
    %1161 = vmatprep.subr.bf16.mxu0 0
    %1162 = vmatpush1.bf16.xpose.msra.mxu0 0
    %1163 = vmatprep.subr.bf16.mxu0 0
    %1164 = vmatpush1.bf16.xpose.msra.mxu0 0
    %1165 = vmatprep.subr.bf16.mxu0 0
    %1166 = vmatpush1.bf16.xpose.msra.mxu0 0
    %1167 = vmatprep.subr.bf16.mxu0 0
    %1168 = vmatpush1.bf16.xpose.msra.mxu0 0
    %1169 = vmatprep.subr.bf16.mxu0 0
    %1170 = vmatpush1.bf16.xpose.msra.mxu0 0
    %1171 = vmatprep.subr.bf16.mxu0 0
    %1172 = vmatpush1.bf16.xpose.msra.mxu0 0
    %1173 = vmatprep.subr.bf16.mxu0 0
    %1174 = vmatpush1.bf16.xpose.msra.mxu0 0
    %1175 = vmatprep.subr.bf16.mxu0 0
    %1176 = vmatpush1.bf16.xpose.msra.mxu0 0
    %1177 = vmatprep.subr.bf16.mxu0 0
    %1178 = vmatpush1.bf16.xpose.msra.mxu0 0
    %1179 = vmatprep.subr.bf16.mxu0 0
    %1180 = vmatpush1.bf16.xpose.msra.mxu0 0
    %1181 = vmatprep.subr.bf16.mxu0 0
    %1182 = vmatpush1.bf16.xpose.msra.mxu0 0
    %1183 = vmatprep.subr.bf16.mxu0 0
    %1184 = vmatpush1.bf16.xpose.msra.mxu0 0
    %1185 = vmatprep.subr.bf16.mxu0 0
    %1186 = vmatpush1.bf16.xpose.msra.mxu0 0
    %1187 = vmatprep.mubr.bf16.mxu0 0
    %1188 = vmatmul.mubr.bf16.gmra.mrb[0].mxu0 %v1150
    %v1189 = vpop.f32.mrb[0].mxu0
    %v1190 = vadd.f32 0.0, %v1189
    %v1191 = vpop.f32.mrb[0].mxu0
    %v1192 = vpop.f32.mrb[0].mxu0
    %v1193 = vpop.f32.mrb[0].mxu0
    %1194 = vdwg.mxu0
    %1196 = vrot.lane.b32.xlu0 %v1095, 96
    %v1197 = vpop.permute.xlu0 %1196
    %v1199 = vsel %vm217, %v1095, 0
    %v1202 = vsel %vm217, %v1197, 0
    %1204 = vmatprep.subr.bf16.mxu0 0
    %1205 = vmatpush1.bf16.xpose.msra.mxu0 %v1202
    %1206 = vmatprep.subr.bf16.mxu0 0
    %1207 = vmatpush1.bf16.xpose.msra.mxu0 0
    %1208 = vmatprep.subr.bf16.mxu0 0
    %1209 = vmatpush1.bf16.xpose.msra.mxu0 0
    %1210 = vmatprep.subr.bf16.mxu0 0
    %1211 = vmatpush1.bf16.xpose.msra.mxu0 0
    %1212 = vmatprep.subr.bf16.mxu0 0
    %1213 = vmatpush1.bf16.xpose.msra.mxu0 0
    %1214 = vmatprep.subr.bf16.mxu0 0
    %1215 = vmatpush1.bf16.xpose.msra.mxu0 0
    %1216 = vmatprep.subr.bf16.mxu0 0
    %1217 = vmatpush1.bf16.xpose.msra.mxu0 0
    %1218 = vmatprep.subr.bf16.mxu0 0
    %1219 = vmatpush1.bf16.xpose.msra.mxu0 0
    %1220 = vmatprep.subr.bf16.mxu0 0
    %1221 = vmatpush1.bf16.xpose.msra.mxu0 0
    %1222 = vmatprep.subr.bf16.mxu0 0
    %1223 = vmatpush1.bf16.xpose.msra.mxu0 0
    %1224 = vmatprep.subr.bf16.mxu0 0
    %1225 = vmatpush1.bf16.xpose.msra.mxu0 0
    %1226 = vmatprep.subr.bf16.mxu0 0
    %1227 = vmatpush1.bf16.xpose.msra.mxu0 0
    %1228 = vmatprep.subr.bf16.mxu0 0
    %1229 = vmatpush1.bf16.xpose.msra.mxu0 0
    %1230 = vmatprep.subr.bf16.mxu0 0
    %1231 = vmatpush1.bf16.xpose.msra.mxu0 0
    %1232 = vmatprep.subr.bf16.mxu0 0
    %1233 = vmatpush1.bf16.xpose.msra.mxu0 0
    %1234 = vmatprep.subr.bf16.mxu0 0
    %1235 = vmatpush1.bf16.xpose.msra.mxu0 0
    %1236 = vmatprep.mubr.bf16.mxu0 0
    %1237 = vmatmul.mubr.bf16.gmra.mrb[0].mxu0 %v1199
    %v1238 = vpop.f32.mrb[0].mxu0
    %v1239 = vadd.f32 0.0, %v1238
    %v1240 = vpop.f32.mrb[0].mxu0
    %v1241 = vpop.f32.mrb[0].mxu0
    %v1242 = vpop.f32.mrb[0].mxu0
    %1243 = vdwg.mxu0
    %1245 = vrot.lane.b32.xlu0 %v1096, 96
    %v1246 = vpop.permute.xlu0 %1245
    %v1248 = vsel %vm217, %v1096, 0
    %v1251 = vsel %vm217, %v1246, 0
    %1253 = vmatprep.subr.bf16.mxu0 0
    %1254 = vmatpush1.bf16.xpose.msra.mxu0 %v1251
    %1255 = vmatprep.subr.bf16.mxu0 0
    %1256 = vmatpush1.bf16.xpose.msra.mxu0 0
    %1257 = vmatprep.subr.bf16.mxu0 0
    %1258 = vmatpush1.bf16.xpose.msra.mxu0 0
    %1259 = vmatprep.subr.bf16.mxu0 0
    %1260 = vmatpush1.bf16.xpose.msra.mxu0 0
    %1261 = vmatprep.subr.bf16.mxu0 0
    %1262 = vmatpush1.bf16.xpose.msra.mxu0 0
    %1263 = vmatprep.subr.bf16.mxu0 0
    %1264 = vmatpush1.bf16.xpose.msra.mxu0 0
    %1265 = vmatprep.subr.bf16.mxu0 0
    %1266 = vmatpush1.bf16.xpose.msra.mxu0 0
    %1267 = vmatprep.subr.bf16.mxu0 0
    %1268 = vmatpush1.bf16.xpose.msra.mxu0 0
    %1269 = vmatprep.subr.bf16.mxu0 0
    %1270 = vmatpush1.bf16.xpose.msra.mxu0 0
    %1271 = vmatprep.subr.bf16.mxu0 0
    %1272 = vmatpush1.bf16.xpose.msra.mxu0 0
    %1273 = vmatprep.subr.bf16.mxu0 0
    %1274 = vmatpush1.bf16.xpose.msra.mxu0 0
    %1275 = vmatprep.subr.bf16.mxu0 0
    %1276 = vmatpush1.bf16.xpose.msra.mxu0 0
    %1277 = vmatprep.subr.bf16.mxu0 0
    %1278 = vmatpush1.bf16.xpose.msra.mxu0 0
    %1279 = vmatprep.subr.bf16.mxu0 0
    %1280 = vmatpush1.bf16.xpose.msra.mxu0 0
    %1281 = vmatprep.subr.bf16.mxu0 0
    %1282 = vmatpush1.bf16.xpose.msra.mxu0 0
    %1283 = vmatprep.subr.bf16.mxu0 0
    %1284 = vmatpush1.bf16.xpose.msra.mxu0 0
    %1285 = vmatprep.mubr.bf16.mxu0 0
    %1286 = vmatmul.mubr.bf16.gmra.mrb[0].mxu0 %v1248
    %v1287 = vpop.f32.mrb[0].mxu0
    %v1288 = vadd.f32 0.0, %v1287
    %v1289 = vpop.f32.mrb[0].mxu0
    %v1290 = vpop.f32.mrb[0].mxu0
    %v1291 = vpop.f32.mrb[0].mxu0
    %1292 = vdwg.mxu0
    %v1293 = vmul.f32 %v1141, 0.35355338
    %v1294 = vmul.f32 %v1190, 0.35355338
    %v1295 = vmul.f32 %v1239, 0.35355338
    %v1296 = vmul.f32 %v1288, 0.35355338
    %v1297 = vsel %vm217, %v1293, -inf
    %1298 = vmax.xlane.f32.xlu0 %v1297
    %v1299 = vpop.xlane.xlu0 %1298
    %v1300 = vsel %vm217, %v1294, -inf
    %1301 = vmax.xlane.f32.xlu0 %v1300
    %v1302 = vpop.xlane.xlu0 %1301
    %v1303 = vsel %vm217, %v1295, -inf
    %1304 = vmax.xlane.f32.xlu0 %v1303
    %v1305 = vpop.xlane.xlu0 %1304
    %v1306 = vsel %vm217, %v1296, -inf
    %1307 = vmax.xlane.f32.xlu0 %v1306
    %v1308 = vpop.xlane.xlu0 %1307
    %v1309 = vsub.f32 %v1293, %v1299
    %v1310 = vsub.f32 %v1294, %v1302
    %v1311 = vsub.f32 %v1295, %v1305
    %v1312 = vsub.f32 %v1296, %v1308
    %v1313 = vmul.f32 %v1309, 1.442695
    %v1314 = vpow.pop %v1313
    %v1315 = vmul.f32 %v1310, 1.442695
    %v1316 = vpow.pop %v1315
    %v1317 = vmul.f32 %v1311, 1.442695
    %v1318 = vpow.pop %v1317
    %v1319 = vmul.f32 %v1312, 1.442695
    %v1320 = vpow.pop %v1319
    %v1321 = vsel %vm217, %v1314, 0.0
    %1322 = vadd.xlane.f32.xlu0 %v1321
    %v1323 = vpop.xlane.xlu0 %1322
    %v1324 = vsel %vm217, %v1316, 0.0
    %1325 = vadd.xlane.f32.xlu0 %v1324
    %v1326 = vpop.xlane.xlu0 %1325
    %v1327 = vsel %vm217, %v1318, 0.0
    %1328 = vadd.xlane.f32.xlu0 %v1327
    %v1329 = vpop.xlane.xlu0 %1328
    %v1330 = vsel %vm217, %v1320, 0.0
    %1331 = vadd.xlane.f32.xlu0 %v1330
    %v1332 = vpop.xlane.xlu0 %1331
    %v1333 = vrcp.pop %v1323
    %v1334 = vmul.f32 %v1314, %v1333
    %v1335 = vrcp.pop %v1326
    %v1336 = vmul.f32 %v1316, %v1335
    %v1337 = vrcp.pop %v1329
    %v1338 = vmul.f32 %v1318, %v1337
    %v1339 = vrcp.pop %v1332
    %v1340 = vmul.f32 %v1320, %v1339
    %v1341 = vpack.c.bf16 %v1334, %v1334
    %v1342 = vpack.c.bf16 %v1336, %v1336
    %v1343 = vpack.c.bf16 %v1338, %v1338
    %v1344 = vpack.c.bf16 %v1340, %v1340
    %1345 = vrot.lane.b32.xlu0 %v1093, 64
    %v1346 = vpop.permute.xlu0 %1345
    %v1348 = vsel %vm217, %v1341, 0
    %v1351 = vsel %vm167, %v1346, 0
    %1353 = vmatprep.subr.bf16.mxu0 0
    %1354 = vmatpush1.bf16.msra.mxu0 %v1351
    %1355 = vmatprep.subr.bf16.mxu0 0
    %1356 = vmatpush1.bf16.msra.mxu0 0
    %1357 = vmatprep.subr.bf16.mxu0 0
    %1358 = vmatpush1.bf16.msra.mxu0 0
    %1359 = vmatprep.subr.bf16.mxu0 0
    %1360 = vmatpush1.bf16.msra.mxu0 0
    %1361 = vmatprep.subr.bf16.mxu0 0
    %1362 = vmatpush1.bf16.msra.mxu0 0
    %1363 = vmatprep.subr.bf16.mxu0 0
    %1364 = vmatpush1.bf16.msra.mxu0 0
    %1365 = vmatprep.subr.bf16.mxu0 0
    %1366 = vmatpush1.bf16.msra.mxu0 0
    %1367 = vmatprep.subr.bf16.mxu0 0
    %1368 = vmatpush1.bf16.msra.mxu0 0
    %1369 = vmatprep.subr.bf16.mxu0 0
    %1370 = vmatpush1.bf16.msra.mxu0 0
    %1371 = vmatprep.subr.bf16.mxu0 0
    %1372 = vmatpush1.bf16.msra.mxu0 0
    %1373 = vmatprep.subr.bf16.mxu0 0
    %1374 = vmatpush1.bf16.msra.mxu0 0
    %1375 = vmatprep.subr.bf16.mxu0 0
    %1376 = vmatpush1.bf16.msra.mxu0 0
    %1377 = vmatprep.subr.bf16.mxu0 0
    %1378 = vmatpush1.bf16.msra.mxu0 0
    %1379 = vmatprep.subr.bf16.mxu0 0
    %1380 = vmatpush1.bf16.msra.mxu0 0
    %1381 = vmatprep.subr.bf16.mxu0 0
    %1382 = vmatpush1.bf16.msra.mxu0 0
    %1383 = vmatprep.subr.bf16.mxu0 0
    %1384 = vmatpush1.bf16.msra.mxu0 0
    %1385 = vmatprep.mubr.bf16.mxu0 0
    %1386 = vmatmul.mubr.bf16.gmra.mrb[0].mxu0 %v1348
    %v1387 = vpop.f32.mrb[0].mxu0
    %v1388 = vadd.f32 0.0, %v1387
    %v1389 = vpop.f32.mrb[0].mxu0
    %v1390 = vpop.f32.mrb[0].mxu0
    %v1391 = vpop.f32.mrb[0].mxu0
    %1392 = vdwg.mxu0
    %1393 = vrot.lane.b32.xlu0 %v1094, 64
    %v1394 = vpop.permute.xlu0 %1393
    %v1396 = vsel %vm217, %v1342, 0
    %v1399 = vsel %vm167, %v1394, 0
    %1401 = vmatprep.subr.bf16.mxu0 0
    %1402 = vmatpush1.bf16.msra.mxu0 %v1399
    %1403 = vmatprep.subr.bf16.mxu0 0
    %1404 = vmatpush1.bf16.msra.mxu0 0
    %1405 = vmatprep.subr.bf16.mxu0 0
    %1406 = vmatpush1.bf16.msra.mxu0 0
    %1407 = vmatprep.subr.bf16.mxu0 0
    %1408 = vmatpush1.bf16.msra.mxu0 0
    %1409 = vmatprep.subr.bf16.mxu0 0
    %1410 = vmatpush1.bf16.msra.mxu0 0
    %1411 = vmatprep.subr.bf16.mxu0 0
    %1412 = vmatpush1.bf16.msra.mxu0 0
    %1413 = vmatprep.subr.bf16.mxu0 0
    %1414 = vmatpush1.bf16.msra.mxu0 0
    %1415 = vmatprep.subr.bf16.mxu0 0
    %1416 = vmatpush1.bf16.msra.mxu0 0
    %1417 = vmatprep.subr.bf16.mxu0 0
    %1418 = vmatpush1.bf16.msra.mxu0 0
    %1419 = vmatprep.subr.bf16.mxu0 0
    %1420 = vmatpush1.bf16.msra.mxu0 0
    %1421 = vmatprep.subr.bf16.mxu0 0
    %1422 = vmatpush1.bf16.msra.mxu0 0
    %1423 = vmatprep.subr.bf16.mxu0 0
    %1424 = vmatpush1.bf16.msra.mxu0 0
    %1425 = vmatprep.subr.bf16.mxu0 0
    %1426 = vmatpush1.bf16.msra.mxu0 0
    %1427 = vmatprep.subr.bf16.mxu0 0
    %1428 = vmatpush1.bf16.msra.mxu0 0
    %1429 = vmatprep.subr.bf16.mxu0 0
    %1430 = vmatpush1.bf16.msra.mxu0 0
    %1431 = vmatprep.subr.bf16.mxu0 0
    %1432 = vmatpush1.bf16.msra.mxu0 0
    %1433 = vmatprep.mubr.bf16.mxu0 0
    %1434 = vmatmul.mubr.bf16.gmra.mrb[0].mxu0 %v1396
    %v1435 = vpop.f32.mrb[0].mxu0
    %v1436 = vadd.f32 0.0, %v1435
    %v1437 = vpop.f32.mrb[0].mxu0
    %v1438 = vpop.f32.mrb[0].mxu0
    %v1439 = vpop.f32.mrb[0].mxu0
    %1440 = vdwg.mxu0
    %1441 = vrot.lane.b32.xlu0 %v1095, 64
    %v1442 = vpop.permute.xlu0 %1441
    %v1444 = vsel %vm217, %v1343, 0
    %v1447 = vsel %vm167, %v1442, 0
    %1449 = vmatprep.subr.bf16.mxu0 0
    %1450 = vmatpush1.bf16.msra.mxu0 %v1447
    %1451 = vmatprep.subr.bf16.mxu0 0
    %1452 = vmatpush1.bf16.msra.mxu0 0
    %1453 = vmatprep.subr.bf16.mxu0 0
    %1454 = vmatpush1.bf16.msra.mxu0 0
    %1455 = vmatprep.subr.bf16.mxu0 0
    %1456 = vmatpush1.bf16.msra.mxu0 0
    %1457 = vmatprep.subr.bf16.mxu0 0
    %1458 = vmatpush1.bf16.msra.mxu0 0
    %1459 = vmatprep.subr.bf16.mxu0 0
    %1460 = vmatpush1.bf16.msra.mxu0 0
    %1461 = vmatprep.subr.bf16.mxu0 0
    %1462 = vmatpush1.bf16.msra.mxu0 0
    %1463 = vmatprep.subr.bf16.mxu0 0
    %1464 = vmatpush1.bf16.msra.mxu0 0
    %1465 = vmatprep.subr.bf16.mxu0 0
    %1466 = vmatpush1.bf16.msra.mxu0 0
    %1467 = vmatprep.subr.bf16.mxu0 0
    %1468 = vmatpush1.bf16.msra.mxu0 0
    %1469 = vmatprep.subr.bf16.mxu0 0
    %1470 = vmatpush1.bf16.msra.mxu0 0
    %1471 = vmatprep.subr.bf16.mxu0 0
    %1472 = vmatpush1.bf16.msra.mxu0 0
    %1473 = vmatprep.subr.bf16.mxu0 0
    %1474 = vmatpush1.bf16.msra.mxu0 0
    %1475 = vmatprep.subr.bf16.mxu0 0
    %1476 = vmatpush1.bf16.msra.mxu0 0
    %1477 = vmatprep.subr.bf16.mxu0 0
    %1478 = vmatpush1.bf16.msra.mxu0 0
    %1479 = vmatprep.subr.bf16.mxu0 0
    %1480 = vmatpush1.bf16.msra.mxu0 0
    %1481 = vmatprep.mubr.bf16.mxu0 0
    %1482 = vmatmul.mubr.bf16.gmra.mrb[0].mxu0 %v1444
    %v1483 = vpop.f32.mrb[0].mxu0
    %v1484 = vadd.f32 0.0, %v1483
    %v1485 = vpop.f32.mrb[0].mxu0
    %v1486 = vpop.f32.mrb[0].mxu0
    %v1487 = vpop.f32.mrb[0].mxu0
    %1488 = vdwg.mxu0
    %1489 = vrot.lane.b32.xlu0 %v1096, 64
    %v1490 = vpop.permute.xlu0 %1489
    %v1492 = vsel %vm217, %v1344, 0
    %v1495 = vsel %vm167, %v1490, 0
    %1497 = vmatprep.subr.bf16.mxu0 0
    %1498 = vmatpush1.bf16.msra.mxu0 %v1495
    %1499 = vmatprep.subr.bf16.mxu0 0
    %1500 = vmatpush1.bf16.msra.mxu0 0
    %1501 = vmatprep.subr.bf16.mxu0 0
    %1502 = vmatpush1.bf16.msra.mxu0 0
    %1503 = vmatprep.subr.bf16.mxu0 0
    %1504 = vmatpush1.bf16.msra.mxu0 0
    %1505 = vmatprep.subr.bf16.mxu0 0
    %1506 = vmatpush1.bf16.msra.mxu0 0
    %1507 = vmatprep.subr.bf16.mxu0 0
    %1508 = vmatpush1.bf16.msra.mxu0 0
    %1509 = vmatprep.subr.bf16.mxu0 0
    %1510 = vmatpush1.bf16.msra.mxu0 0
    %1511 = vmatprep.subr.bf16.mxu0 0
    %1512 = vmatpush1.bf16.msra.mxu0 0
    %1513 = vmatprep.subr.bf16.mxu0 0
    %1514 = vmatpush1.bf16.msra.mxu0 0
    %1515 = vmatprep.subr.bf16.mxu0 0
    %1516 = vmatpush1.bf16.msra.mxu0 0
    %1517 = vmatprep.subr.bf16.mxu0 0
    %1518 = vmatpush1.bf16.msra.mxu0 0
    %1519 = vmatprep.subr.bf16.mxu0 0
    %1520 = vmatpush1.bf16.msra.mxu0 0
    %1521 = vmatprep.subr.bf16.mxu0 0
    %1522 = vmatpush1.bf16.msra.mxu0 0
    %1523 = vmatprep.subr.bf16.mxu0 0
    %1524 = vmatpush1.bf16.msra.mxu0 0
    %1525 = vmatprep.subr.bf16.mxu0 0
    %1526 = vmatpush1.bf16.msra.mxu0 0
    %1527 = vmatprep.subr.bf16.mxu0 0
    %1528 = vmatpush1.bf16.msra.mxu0 0
    %1529 = vmatprep.mubr.bf16.mxu0 0
    %1530 = vmatmul.mubr.bf16.gmra.mrb[0].mxu0 %v1492
    %v1531 = vpop.f32.mrb[0].mxu0
    %v1532 = vadd.f32 0.0, %v1531
    %v1533 = vpop.f32.mrb[0].mxu0
    %v1534 = vpop.f32.mrb[0].mxu0
    %v1535 = vpop.f32.mrb[0].mxu0
    %1536 = vdwg.mxu0
    %v1538 = vrot.slane %v1388, 2
    %1539 = vrot.lane.b32.xlu0 %v1538, 8
    %v1540 = vpop.permute.xlu0 %1539
    %v1542 = vrot.slane %v1388, 4
    %1543 = vrot.lane.b32.xlu0 %v1542, 16
    %v1544 = vpop.permute.xlu0 %1543
    %v1546 = vrot.slane %v1388, 6
    %1547 = vrot.lane.b32.xlu0 %v1546, 24
    %v1548 = vpop.permute.xlu0 %1547
    %v1550 = vsel %vm217, %v1388, %v1540
    %v1551 = vsel %vm669, %v1550, %v1544
    %v1552 = vsel %vm671, %v1551, %v1548
    %v1554 = vrot.slane %v1436, 2
    %1555 = vrot.lane.b32.xlu0 %v1554, 8
    %v1556 = vpop.permute.xlu0 %1555
    %v1558 = vrot.slane %v1436, 4
    %1559 = vrot.lane.b32.xlu0 %v1558, 16
    %v1560 = vpop.permute.xlu0 %1559
    %v1562 = vrot.slane %v1436, 6
    %1563 = vrot.lane.b32.xlu0 %v1562, 24
    %v1564 = vpop.permute.xlu0 %1563
    %v1566 = vsel %vm217, %v1436, %v1556
    %v1567 = vsel %vm669, %v1566, %v1560
    %v1568 = vsel %vm671, %v1567, %v1564
    %v1570 = vrot.slane %v1484, 2
    %1571 = vrot.lane.b32.xlu0 %v1570, 8
    %v1572 = vpop.permute.xlu0 %1571
    %v1574 = vrot.slane %v1484, 4
    %1575 = vrot.lane.b32.xlu0 %v1574, 16
    %v1576 = vpop.permute.xlu0 %1575
    %v1578 = vrot.slane %v1484, 6
    %1579 = vrot.lane.b32.xlu0 %v1578, 24
    %v1580 = vpop.permute.xlu0 %1579
    %v1582 = vsel %vm217, %v1484, %v1572
    %v1583 = vsel %vm669, %v1582, %v1576
    %v1584 = vsel %vm671, %v1583, %v1580
    %v1586 = vrot.slane %v1532, 2
    %1587 = vrot.lane.b32.xlu0 %v1586, 8
    %v1588 = vpop.permute.xlu0 %1587
    %v1590 = vrot.slane %v1532, 4
    %1591 = vrot.lane.b32.xlu0 %v1590, 16
    %v1592 = vpop.permute.xlu0 %1591
    %v1594 = vrot.slane %v1532, 6
    %1595 = vrot.lane.b32.xlu0 %v1594, 24
    %v1596 = vpop.permute.xlu0 %1595
    %v1598 = vsel %vm217, %v1532, %v1588
    %v1599 = vsel %vm669, %v1598, %v1592
    %v1600 = vsel %vm671, %v1599, %v1596
    %v1602 = vrot.slane %v1568, 6
    %v1605 = vrot.slane %v1584, 4
    %v1608 = vrot.slane %v1600, 2
    %v1610 = vsel %vm165, %v1552, %v1602
    %v1611 = vsel %vm167, %v1610, %v1605
    %v1612 = vsel %vm169, %v1611, %v1608
    %v1613 = vadd.f32 %v993, %v737
    %v1614 = vpack.c.bf16 %v1612, %v1612
    %v1616 = vsel %vm108, %v1614, 0
    %1618 = vmatprep.subr.bf16.mxu0 0
    %1619 = vmatpush1.bf16.msra.mxu0 %v749
    %1620 = vmatprep.subr.bf16.mxu0 0
    %1621 = vmatpush1.bf16.msra.mxu0 %v750
    %1622 = vmatprep.subr.bf16.mxu0 0
    %1623 = vmatpush1.bf16.msra.mxu0 0
    %1624 = vmatprep.subr.bf16.mxu0 0
    %1625 = vmatpush1.bf16.msra.mxu0 0
    %1626 = vmatprep.subr.bf16.mxu0 0
    %1627 = vmatpush1.bf16.msra.mxu0 0
    %1628 = vmatprep.subr.bf16.mxu0 0
    %1629 = vmatpush1.bf16.msra.mxu0 0
    %1630 = vmatprep.subr.bf16.mxu0 0
    %1631 = vmatpush1.bf16.msra.mxu0 0
    %1632 = vmatprep.subr.bf16.mxu0 0
    %1633 = vmatpush1.bf16.msra.mxu0 0
    %1634 = vmatprep.subr.bf16.mxu0 0
    %1635 = vmatpush1.bf16.msra.mxu0 0
    %1636 = vmatprep.subr.bf16.mxu0 0
    %1637 = vmatpush1.bf16.msra.mxu0 0
    %1638 = vmatprep.subr.bf16.mxu0 0
    %1639 = vmatpush1.bf16.msra.mxu0 0
    %1640 = vmatprep.subr.bf16.mxu0 0
    %1641 = vmatpush1.bf16.msra.mxu0 0
    %1642 = vmatprep.subr.bf16.mxu0 0
    %1643 = vmatpush1.bf16.msra.mxu0 0
    %1644 = vmatprep.subr.bf16.mxu0 0
    %1645 = vmatpush1.bf16.msra.mxu0 0
    %1646 = vmatprep.subr.bf16.mxu0 0
    %1647 = vmatpush1.bf16.msra.mxu0 0
    %1648 = vmatprep.subr.bf16.mxu0 0
    %1649 = vmatpush1.bf16.msra.mxu0 0
    %1650 = vmatprep.mubr.bf16.mxu0 0
    %1651 = vmatmul.mubr.bf16.gmra.mrb[0].mxu0 %v1616
    %v1652 = vpop.f32.mrb[0].mxu0
    %v1653 = vadd.f32 0.0, %v1652
    %v1654 = vpop.f32.mrb[0].mxu0
    %v1655 = vpop.f32.mrb[0].mxu0
    %v1656 = vpop.f32.mrb[0].mxu0
    %1657 = vdwg.mxu0
    %v1658 = vadd.f32 %v1613, %v1653
    %v1659 = vsel %vm108, %v1658, 0.0
    %1660 = vadd.xlane.f32.xlu0 %v1659
    %v1661 = vpop.xlane.xlu0 %1660
    %v1662 = vmul.f32 %v1661, %v800
    %v1663 = vsub.f32 %v1658, %v1662
    %v1664 = vmul.f32 %v1663, %v1663
    %v1665 = vsel %vm108, %v1664, 0.0
    %1666 = vadd.xlane.f32.xlu0 %v1665
    %v1667 = vpop.xlane.xlu0 %1666
    %v1668 = vmul.f32 %v1667, %v800
    %v1669 = vadd.f32 %v1668, 1e-05
    %v1670 = vrsqrt.pop %v1669
    %v1671 = vmul.f32 %v1663, %v1670
    %v1672 = vmul.f32 %v1671, %v815
    %v1673 = vadd.f32 %v1672, %v822
    %v1674 = vpack.c.bf16 %v1673, %v1673
    %v1676 = vsel %vm108, %v1674, 0
    %1678 = vmatprep.subr.bf16.mxu0 0
    %1679 = vmatpush1.bf16.msra.mxu0 %v840
    %1680 = vmatprep.subr.bf16.mxu0 0
    %1681 = vmatpush1.bf16.msra.mxu0 %v841
    %1682 = vmatprep.subr.bf16.mxu0 0
    %1683 = vmatpush1.bf16.msra.mxu0 0
    %1684 = vmatprep.subr.bf16.mxu0 0
    %1685 = vmatpush1.bf16.msra.mxu0 0
    %1686 = vmatprep.subr.bf16.mxu0 0
    %1687 = vmatpush1.bf16.msra.mxu0 0
    %1688 = vmatprep.subr.bf16.mxu0 0
    %1689 = vmatpush1.bf16.msra.mxu0 0
    %1690 = vmatprep.subr.bf16.mxu0 0
    %1691 = vmatpush1.bf16.msra.mxu0 0
    %1692 = vmatprep.subr.bf16.mxu0 0
    %1693 = vmatpush1.bf16.msra.mxu0 0
    %1694 = vmatprep.subr.bf16.mxu0 0
    %1695 = vmatpush1.bf16.msra.mxu0 0
    %1696 = vmatprep.subr.bf16.mxu0 0
    %1697 = vmatpush1.bf16.msra.mxu0 0
    %1698 = vmatprep.subr.bf16.mxu0 0
    %1699 = vmatpush1.bf16.msra.mxu0 0
    %1700 = vmatprep.subr.bf16.mxu0 0
    %1701 = vmatpush1.bf16.msra.mxu0 0
    %1702 = vmatprep.subr.bf16.mxu0 0
    %1703 = vmatpush1.bf16.msra.mxu0 0
    %1704 = vmatprep.subr.bf16.mxu0 0
    %1705 = vmatpush1.bf16.msra.mxu0 0
    %1706 = vmatprep.subr.bf16.mxu0 0
    %1707 = vmatpush1.bf16.msra.mxu0 0
    %1708 = vmatprep.subr.bf16.mxu0 0
    %1709 = vmatpush1.bf16.msra.mxu0 0
    %1710 = vmatprep.mubr.bf16.mxu0 0
    %1711 = vmatmul.mubr.bf16.gmra.mrb[0].mxu0 %v1676
    %v1712 = vpop.f32.mrb[0].mxu0
    %v1713 = vadd.f32 %v830, %v1712
    %v1714 = vpop.f32.mrb[0].mxu0
    %v1715 = vpop.f32.mrb[0].mxu0
    %v1716 = vpop.f32.mrb[0].mxu0
    %1717 = vdwg.mxu0
    %v1718 = vmax.f32 %v1713, 0.0
    %v1719 = vpack.c.bf16 %v1718, %v1718
    %v1721 = vsel %vm919, %v1719, 0
    %1723 = vmatprep.subr.bf16.mxu0 0
    %1724 = vmatpush1.bf16.msra.mxu0 %v911
    %1725 = vmatprep.subr.bf16.mxu0 0
    %1726 = vmatpush1.bf16.msra.mxu0 %v912
    %1727 = vmatprep.subr.bf16.mxu0 0
    %1728 = vmatpush1.bf16.msra.mxu0 %v913
    %1729 = vmatprep.subr.bf16.mxu0 0
    %1730 = vmatpush1.bf16.msra.mxu0 %v914
    %1731 = vmatprep.subr.bf16.mxu0 0
    %1732 = vmatpush1.bf16.msra.mxu0 0
    %1733 = vmatprep.subr.bf16.mxu0 0
    %1734 = vmatpush1.bf16.msra.mxu0 0
    %1735 = vmatprep.subr.bf16.mxu0 0
    %1736 = vmatpush1.bf16.msra.mxu0 0
    %1737 = vmatprep.subr.bf16.mxu0 0
    %1738 = vmatpush1.bf16.msra.mxu0 0
    %1739 = vmatprep.subr.bf16.mxu0 0
    %1740 = vmatpush1.bf16.msra.mxu0 0
    %1741 = vmatprep.subr.bf16.mxu0 0
    %1742 = vmatpush1.bf16.msra.mxu0 0
    %1743 = vmatprep.subr.bf16.mxu0 0
    %1744 = vmatpush1.bf16.msra.mxu0 0
    %1745 = vmatprep.subr.bf16.mxu0 0
    %1746 = vmatpush1.bf16.msra.mxu0 0
    %1747 = vmatprep.subr.bf16.mxu0 0
    %1748 = vmatpush1.bf16.msra.mxu0 0
    %1749 = vmatprep.subr.bf16.mxu0 0
    %1750 = vmatpush1.bf16.msra.mxu0 0
    %1751 = vmatprep.subr.bf16.mxu0 0
    %1752 = vmatpush1.bf16.msra.mxu0 0
    %1753 = vmatprep.subr.bf16.mxu0 0
    %1754 = vmatpush1.bf16.msra.mxu0 0
    %1755 = vmatprep.mubr.bf16.mxu0 0
    %1756 = vmatmul.mubr.bf16.gmra.mrb[0].mxu0 %v1721
    %v1757 = vpop.f32.mrb[0].mxu0
    %v1758 = vadd.f32 %v893, %v1757
    %v1759 = vpop.f32.mrb[0].mxu0
    %v1760 = vpop.f32.mrb[0].mxu0
    %v1761 = vpop.f32.mrb[0].mxu0
    %1762 = vdwg.mxu0
    %v1763 = vadd.f32 %v1758, %v1673
    %v1764 = vsel %vm108, %v1763, 0.0
    %1765 = vadd.xlane.f32.xlu0 %v1764
    %v1766 = vpop.xlane.xlu0 %1765
    %v1767 = vmul.f32 %v1766, %v800
    %v1768 = vsub.f32 %v1763, %v1767
    %v1769 = vmul.f32 %v1768, %v1768
    %v1770 = vsel %vm108, %v1769, 0.0
    %1771 = vadd.xlane.f32.xlu0 %v1770
    %v1772 = vpop.xlane.xlu0 %1771
    %v1773 = vmul.f32 %v1772, %v800
    %v1774 = vadd.f32 %v1773, 1e-05
    %v1775 = vrsqrt.pop %v1774
    %v1776 = vmul.f32 %v1768, %v1775
    %v1777 = vmul.f32 %v1776, %v981
    %v1778 = vadd.f32 %v1777, %v988
    %s1779 = scalar_lea.vmem [#allocation5], 8
    %1780 = vst.msk [vmem:[%s1779] sm:$0xff] %vm108, %v1778
    // Predicated region
    $region58: #{tpu_custom_call.1} parent=1 // pred_check
      _
    $region59: #{tpu_custom_call.1} parent=1 // pred_check_branch
      %1782 = sbr.rel (0) target = $region61
    $region60: #{tpu_custom_call.1} parent=1 // pred_region
      %s1784 = ssub.s32 256, 256
      %1785 = vsyncadd [#allocation4], %s1784
      %s1786 = sshll.u32 [#allocation5], 4
      %s1787 = int_to_ptr.vmem [resolvable:$true] %s1786
      %1792 = dma.vmem_to_hbm [thread:$0]  %s1787, 256, %s13, [#allocation4], 128, 128, 8
    $region61: #{tpu_custom_call.1} parent=1 // pred_fallthru
      _
    // Predicated region
    $region62: #{tpu_custom_call.1} parent=1 // pred_check
      _
    $region63: #{tpu_custom_call.1} parent=1 // pred_check_branch
      %1794 = sbr.rel (0) target = $region65
    $region64: #{tpu_custom_call.1} parent=1 // pred_region
      %1795 = dma.done [#allocation4], 256
    $region65: #{tpu_custom_call.1} parent=1 // pred_fallthru
      _
    %1796 = vsyncpa [#allocation3], 1
    %1797 = vsyncpa [#allocation4], 1

</llo_original>
